<compile_context>
chip_gen: v7x
topology: tpu7x:2x2x1
jax: 0.10.0
libtpu: 0.0.40
codegen_flags: <defaults>
</compile_context>

<pallas_src>
import math
import numpy as np
import jax
import jax.numpy as jnp
from jax.experimental import pallas as pl
from jax.experimental.pallas import tpu as pltpu


def _pick_q_tile(S):
    # Query-tile size: bounds the (tq, S) score working set and pipelines the output
    # writeback.  Must divide S (no partial-tile masking implemented).
    for cand in (512, 256, 128):
        if S >= cand and S % cand == 0:
            return cand
    return S


# ---------------------------------------------------------------------------
# Fused MHA wrapper: packs weights head-batched and launches one Pallas kernel.
# ---------------------------------------------------------------------------
def multi_head_attention(x, params):
    """x: (B, S, d_token) float32 -> (B, S, d_token) float32 (mask=None path)."""
    B, S, D = x.shape
    wq, bq = params["wq"], params["bq"]          # (H, D, dh), (H, 1, dh)
    wk, bk = params["wk"], params["bk"]
    wv, bv = params["wv"], params["bv"]
    wo, bo = params["wo"], params["bo"]          # (D, D) pre-transposed, (1, D)
    H, _, dh = wq.shape
    assert H * dh == D
    scale = 1.0 / math.sqrt(dh)

    # ---- one-off packing (in production these would be stored pre-packed) ----
    # Per-head QKV weights stacked (3, H, D, dh); 1/sqrt(dh) folded into Q weight+bias.
    wqkv = jnp.stack([wq * scale, wk, wv], axis=0).astype(jnp.bfloat16)   # (3, H, D, dh)
    bqkv = jnp.stack([bq * scale, bk, bv], axis=0).astype(jnp.float32)    # (3, H, 1, dh)
    # Output weight head-major (H, dh, D): y = sum_h  head_h @ wo_h  (== cat @ wo).
    wo_h = wo.reshape(H, dh, D).astype(jnp.bfloat16)
    bo_f32 = bo.astype(jnp.float32)

    tq = _pick_q_tile(S)
    n_qt = S // tq

    def kernel(x_ref, wqkv_ref, bqkv_ref, wo_ref, bo_ref, o_ref, kh_ref, vh_ref):
        # x_ref:    (1, S, D)  f32  -- full sequence for this batch element (resident)
        # wqkv_ref: (3, H, D, dh) bf16   bqkv_ref: (3, H, 1, dh) f32
        # wo_ref:   (H, dh, D) bf16      bo_ref:   (1, D) f32
        # o_ref:    (1, tq, D) f32  -- one query tile
        # kh_ref / vh_ref: (H, S, dh) bf16 scratch -- resident K/V per batch element
        qi = pl.program_id(1)

        # ---- K/V projection: once per batch element, head-batched matmuls ----
        @pl.when(qi == 0)
        def _():
            xb = jnp.broadcast_to(x_ref[0].astype(jnp.bfloat16), (H, S, D))
            k = jnp.einsum("hsd,hde->hse", xb, wqkv_ref[1],
                           preferred_element_type=jnp.float32) + bqkv_ref[1]
            v = jnp.einsum("hsd,hde->hse", xb, wqkv_ref[2],
                           preferred_element_type=jnp.float32) + bqkv_ref[2]
            kh_ref[...] = k.astype(jnp.bfloat16)
            vh_ref[...] = v.astype(jnp.bfloat16)

        # ---- Q projection for this query tile (scale already folded in) ----
        q0 = pl.multiple_of(qi * tq, tq)
        xq = jnp.broadcast_to(x_ref[0, pl.ds(q0, tq), :].astype(jnp.bfloat16),
                              (H, tq, D))
        q = jnp.einsum("hsd,hde->hse", xq, wqkv_ref[0],
                       preferred_element_type=jnp.float32) + bqkv_ref[0]   # (H, tq, dh)

        # ---- scores: head-batched, contracting dh directly (no explicit K^T) ----
        s = jnp.einsum("hqd,hkd->hqk", q.astype(jnp.bfloat16), kh_ref[...],
                       preferred_element_type=jnp.float32)                 # (H, tq, S)
        # TODO(synk): optional boolean attention mask (masked_fill -1e9) not implemented.

        # ---- softmax in f32 (max-stabilized); approx reciprocal on the EUP ----
        m = jnp.max(s, axis=-1, keepdims=True)
        e = jnp.exp(s - m)
        p = e * pl.reciprocal(jnp.sum(e, axis=-1, keepdims=True), approx=True)

        # ---- PV: head-batched ----
        pv = jnp.einsum("hqk,hkd->hqd", p.astype(jnp.bfloat16), vh_ref[...],
                        preferred_element_type=jnp.float32)                # (H, tq, dh)

        # ---- fused output projection: head-batched contraction, f32 accumulate ----
        yh = jnp.einsum("hqd,hdf->hqf", pv.astype(jnp.bfloat16), wo_ref[...],
                        preferred_element_type=jnp.float32)                # (H, tq, D)
        y = jnp.sum(yh, axis=0) + bo_ref[...]                              # (tq, D)
        o_ref[0] = y.astype(o_ref.dtype)

    # ---- explicit scoped-VMEM limit sized from the working set (with headroom) ----
    f32b, bf16b = 4, 2
    est_vmem = (
        2 * (S * D * f32b)                              # x block (double-buffered)
        + 2 * (tq * D * f32b)                           # out block (double-buffered)
        + 2 * (3 * H * D * dh * bf16b + 3 * H * dh * f32b
               + H * dh * D * bf16b + D * f32b)         # resident weights (2x buffered)
        + 2 * (H * S * dh * bf16b)                      # K/V scratch
        + H * S * D * bf16b                             # broadcast x for K/V projection
        + 4 * (H * tq * S * f32b)                       # scores / exp / probs
        + 2 * (H * tq * D * f32b)                       # yh + slack
    )
    vmem_limit = int(min(max(2 * est_vmem, 32 * 1024 * 1024), 48 * 1024 * 1024))

    return pl.pallas_call(
        kernel,
        grid=(B, n_qt),
        in_specs=[
            pl.BlockSpec((1, S, D), lambda b, q: (b, 0, 0)),          # x (per batch, resident)
            pl.BlockSpec((3, H, D, dh), lambda b, q: (0, 0, 0, 0)),   # packed QKV weights
            pl.BlockSpec((3, H, 1, dh), lambda b, q: (0, 0, 0, 0)),   # packed QKV biases
            pl.BlockSpec((H, dh, D), lambda b, q: (0, 0, 0)),         # output weight (head-major)
            pl.BlockSpec((1, D), lambda b, q: (0, 0)),                # output bias
        ],
        out_specs=pl.BlockSpec((1, tq, D), lambda b, q: (b, q, 0)),
        out_shape=jax.ShapeDtypeStruct((B, S, D), jnp.float32),
        scratch_shapes=[
            pltpu.VMEM((H, S, dh), jnp.bfloat16),   # resident K
            pltpu.VMEM((H, S, dh), jnp.bfloat16),   # resident V
        ],
        compiler_params=pltpu.CompilerParams(
            dimension_semantics=("parallel", "arbitrary"),
            vmem_limit_bytes=vmem_limit),
    )(x, wqkv, bqkv, wo_h, bo_f32)


# ---------------------------------------------------------------------------
# Pure-JAX f32 reference (semantics of the PyTorch module, mask=None path)
# ---------------------------------------------------------------------------
def multi_head_attention_ref(x, params):
    wq, bq = params["wq"], params["bq"]
    wk, bk = params["wk"], params["bk"]
    wv, bv = params["wv"], params["bv"]
    wo, bo = params["wo"], params["bo"]
    H, D, dh = wq.shape

    heads = []
    for h in range(H):
        q = x @ wq[h] + bq[h]
        k = x @ wk[h] + bk[h]
        v = x @ wv[h] + bv[h]
        scores = jnp.einsum("bqd,bkd->bqk", q, k) / np.sqrt(dh)
        w = jax.nn.softmax(scores, axis=-1)
        heads.append(jnp.einsum("bqk,bkd->bqd", w, v))
    cat = jnp.concatenate(heads, axis=-1)
    return cat @ wo + bo


# ---------------------------------------------------------------------------
# Deterministic parameter construction (xavier_uniform weights, zero biases)
# ---------------------------------------------------------------------------
def make_params(key, d_token, n_heads):
    d_head = d_token // n_heads
    ks = jax.random.split(key, 4)

    def xavier(k, shape, fan_in, fan_out):
        bound = math.sqrt(6.0 / (fan_in + fan_out))
        return jax.random.uniform(k, shape, jnp.float32, -bound, bound)

    # per-head q/k/v weights stored as (H, d_token, d_head)  (= torch weight.T)
    wq = xavier(ks[0], (n_heads, d_token, d_head), d_token, d_head)
    wk = xavier(ks[1], (n_heads, d_token, d_head), d_token, d_head)
    wv = xavier(ks[2], (n_heads, d_token, d_head), d_token, d_head)
    zero_b = jnp.zeros((n_heads, 1, d_head), jnp.float32)

    # output linear, stored pre-transposed as (d_token, d_token) so y = x @ wo + bo
    wo = xavier(ks[3], (d_token, d_token), d_token, d_token)
    bo = jnp.zeros((1, d_token), jnp.float32)

    return {"wq": wq, "bq": zero_b, "wk": wk, "bk": zero_b,
            "wv": wv, "bv": zero_b, "wo": wo, "bo": bo}


if __name__ == "__main__":
    B, S, d_token, n_heads = 2, 8, 32, 4
    key = jax.random.PRNGKey(0)
    kx, kp = jax.random.split(key)

    x = jax.random.normal(kx, (B, S, d_token), jnp.float32)
    params = make_params(kp, d_token, n_heads)

    out = jax.block_until_ready(multi_head_attention(x, params))

    ref = multi_head_attention_ref(x, params)
    # Looser tolerance: kernel uses bf16 MXU operands + approx reciprocal.
    np.testing.assert_allclose(np.asarray(out), np.asarray(ref), rtol=5e-2, atol=5e-2)

    print("KERNEL_OK")
</pallas_src>

<mosaic_0001>
module attributes {stable_mosaic.version = 11 : i64} {
  func.func @kernel(%arg0: i32, %arg1: i32, %arg2: memref<1x8x32xf32, #tpu.memory_space<vmem>>, %arg3: memref<3x4x32x8xbf16, #tpu.memory_space<vmem>>, %arg4: memref<3x4x1x8xf32, #tpu.memory_space<vmem>>, %arg5: memref<4x8x32xbf16, #tpu.memory_space<vmem>>, %arg6: memref<1x32xf32, #tpu.memory_space<vmem>>, %arg7: memref<1x8x32xf32, #tpu.memory_space<vmem>>, %arg8: memref<4x8x8xbf16, #tpu.memory_space<vmem>>, %arg9: memref<4x8x8xbf16, #tpu.memory_space<vmem>>) attributes {dimension_semantics = [#tpu.dimension_semantics<parallel>, #tpu.dimension_semantics<arbitrary>], iteration_bounds = array<i64: 2, 1>, scalar_prefetch = 0 : i64, scratch_operands = 2 : i64, tpu.core_type = #tpu.core_type<tc>, window_params = [{transform_indices = @transform_0, window_bounds = array<i64: 1, 8, 32>}, {pipeline_mode = #tpu.pipeline_mode<synchronous>, transform_indices = @transform_1, window_bounds = array<i64: 3, 4, 32, 8>}, {pipeline_mode = #tpu.pipeline_mode<synchronous>, transform_indices = @transform_2, window_bounds = array<i64: 3, 4, 1, 8>}, {pipeline_mode = #tpu.pipeline_mode<synchronous>, transform_indices = @transform_3, window_bounds = array<i64: 4, 8, 32>}, {pipeline_mode = #tpu.pipeline_mode<synchronous>, transform_indices = @transform_4, window_bounds = array<i64: 1, 32>}, {transform_indices = @transform_5, window_bounds = array<i64: 1, 8, 32>}]} {
    %c0_i32 = arith.constant 0 : i32
    %0 = arith.cmpi eq, %arg1, %c0_i32 : i32
    %1 = arith.extui %0 : i1 to i32
    %c0_i32_0 = arith.constant 0 : i32
    %2 = arith.cmpi ne, %1, %c0_i32_0 : i32
    scf.if %2 {
      %c0_30 = arith.constant 0 : index
      %c0_31 = arith.constant 0 : index
      %c0_32 = arith.constant 0 : index
      %44 = vector.load %arg2[%c0_30, %c0_31, %c0_32] : memref<1x8x32xf32, #tpu.memory_space<vmem>>, vector<1x8x32xf32>
      %45 = vector.shape_cast %44 : vector<1x8x32xf32> to vector<8x32xf32>
      %46 = arith.truncf %45 : vector<8x32xf32> to vector<8x32xbf16>
      %47 = vector.shape_cast %46 : vector<8x32xbf16> to vector<1x8x32xbf16>
      %48 = vector.broadcast %47 : vector<1x8x32xbf16> to vector<4x8x32xbf16>
      %c1 = arith.constant 1 : index
      %c0_33 = arith.constant 0 : index
      %c0_34 = arith.constant 0 : index
      %c0_35 = arith.constant 0 : index
      %49 = vector.load %arg3[%c1, %c0_33, %c0_34, %c0_35] : memref<3x4x32x8xbf16, #tpu.memory_space<vmem>>, vector<1x4x32x8xbf16>
      %50 = vector.shape_cast %49 : vector<1x4x32x8xbf16> to vector<4x32x8xbf16>
      "tpu.trace_start"() <{level = 10 : i32, message = "hsd,hde->hse"}> : () -> ()
      %cst_36 = arith.constant dense<0.000000e+00> : vector<4x8x8xf32>
      %51 = tpu.matmul %48, %50, %cst_36 {dimension_numbers = #tpu.dot_dimension_numbers<[2], [1], [1], [2], [0, 0, 0, 1, 1, 2], [0], [0]>} : vector<4x8x32xbf16>, vector<4x32x8xbf16>, vector<4x8x8xf32> -> vector<4x8x8xf32>
      "tpu.trace_stop"() : () -> ()
      %c1_37 = arith.constant 1 : index
      %c0_38 = arith.constant 0 : index
      %c0_39 = arith.constant 0 : index
      %c0_40 = arith.constant 0 : index
      %52 = vector.load %arg4[%c1_37, %c0_38, %c0_39, %c0_40] : memref<3x4x1x8xf32, #tpu.memory_space<vmem>>, vector<1x4x1x8xf32>
      %53 = vector.shape_cast %52 : vector<1x4x1x8xf32> to vector<4x1x8xf32>
      %54 = vector.broadcast %53 : vector<4x1x8xf32> to vector<4x8x8xf32>
      %55 = arith.addf %51, %54 : vector<4x8x8xf32>
      %c2 = arith.constant 2 : index
      %c0_41 = arith.constant 0 : index
      %c0_42 = arith.constant 0 : index
      %c0_43 = arith.constant 0 : index
      %56 = vector.load %arg3[%c2, %c0_41, %c0_42, %c0_43] : memref<3x4x32x8xbf16, #tpu.memory_space<vmem>>, vector<1x4x32x8xbf16>
      %57 = vector.shape_cast %56 : vector<1x4x32x8xbf16> to vector<4x32x8xbf16>
      "tpu.trace_start"() <{level = 10 : i32, message = "hsd,hde->hse"}> : () -> ()
      %cst_44 = arith.constant dense<0.000000e+00> : vector<4x8x8xf32>
      %58 = tpu.matmul %48, %57, %cst_44 {dimension_numbers = #tpu.dot_dimension_numbers<[2], [1], [1], [2], [0, 0, 0, 1, 1, 2], [0], [0]>} : vector<4x8x32xbf16>, vector<4x32x8xbf16>, vector<4x8x8xf32> -> vector<4x8x8xf32>
      "tpu.trace_stop"() : () -> ()
      %c2_45 = arith.constant 2 : index
      %c0_46 = arith.constant 0 : index
      %c0_47 = arith.constant 0 : index
      %c0_48 = arith.constant 0 : index
      %59 = vector.load %arg4[%c2_45, %c0_46, %c0_47, %c0_48] : memref<3x4x1x8xf32, #tpu.memory_space<vmem>>, vector<1x4x1x8xf32>
      %60 = vector.shape_cast %59 : vector<1x4x1x8xf32> to vector<4x1x8xf32>
      %61 = vector.broadcast %60 : vector<4x1x8xf32> to vector<4x8x8xf32>
      %62 = arith.addf %58, %61 : vector<4x8x8xf32>
      %63 = arith.truncf %55 : vector<4x8x8xf32> to vector<4x8x8xbf16>
      %c0_49 = arith.constant 0 : index
      %c0_50 = arith.constant 0 : index
      %c0_51 = arith.constant 0 : index
      %64 = vector.load %arg8[%c0_49, %c0_50, %c0_51] : memref<4x8x8xbf16, #tpu.memory_space<vmem>>, vector<4x8x8xbf16>
      tpu.vector_store %arg8[%c0_49, %c0_50, %c0_51], %63 {strides = array<i32>} : memref<4x8x8xbf16, #tpu.memory_space<vmem>>, vector<4x8x8xbf16>,
      %65 = arith.truncf %62 : vector<4x8x8xf32> to vector<4x8x8xbf16>
      %c0_52 = arith.constant 0 : index
      %c0_53 = arith.constant 0 : index
      %c0_54 = arith.constant 0 : index
      %66 = vector.load %arg9[%c0_52, %c0_53, %c0_54] : memref<4x8x8xbf16, #tpu.memory_space<vmem>>, vector<4x8x8xbf16>
      tpu.vector_store %arg9[%c0_52, %c0_53, %c0_54], %65 {strides = array<i32>} : memref<4x8x8xbf16, #tpu.memory_space<vmem>>, vector<4x8x8xbf16>,
    } else {
    }
    %c8_i32 = arith.constant 8 : i32
    %3 = arith.muli %arg1, %c8_i32 : i32
    %4 = tpu.assume_multiple %3, 8 : i32
    %c0 = arith.constant 0 : index
    %5 = arith.index_cast %4 : i32 to index
    %c0_1 = arith.constant 0 : index
    %6 = vector.load %arg2[%c0, %5, %c0_1] : memref<1x8x32xf32, #tpu.memory_space<vmem>>, vector<1x8x32xf32>
    %7 = vector.shape_cast %6 : vector<1x8x32xf32> to vector<8x32xf32>
    %8 = arith.truncf %7 : vector<8x32xf32> to vector<8x32xbf16>
    %9 = vector.shape_cast %8 : vector<8x32xbf16> to vector<1x8x32xbf16>
    %10 = vector.broadcast %9 : vector<1x8x32xbf16> to vector<4x8x32xbf16>
    %c0_2 = arith.constant 0 : index
    %c0_3 = arith.constant 0 : index
    %c0_4 = arith.constant 0 : index
    %c0_5 = arith.constant 0 : index
    %11 = vector.load %arg3[%c0_2, %c0_3, %c0_4, %c0_5] : memref<3x4x32x8xbf16, #tpu.memory_space<vmem>>, vector<1x4x32x8xbf16>
    %12 = vector.shape_cast %11 : vector<1x4x32x8xbf16> to vector<4x32x8xbf16>
    "tpu.trace_start"() <{level = 10 : i32, message = "hsd,hde->hse"}> : () -> ()
    %cst = arith.constant dense<0.000000e+00> : vector<4x8x8xf32>
    %13 = tpu.matmul %10, %12, %cst {dimension_numbers = #tpu.dot_dimension_numbers<[2], [1], [1], [2], [0, 0, 0, 1, 1, 2], [0], [0]>} : vector<4x8x32xbf16>, vector<4x32x8xbf16>, vector<4x8x8xf32> -> vector<4x8x8xf32>
    "tpu.trace_stop"() : () -> ()
    %c0_6 = arith.constant 0 : index
    %c0_7 = arith.constant 0 : index
    %c0_8 = arith.constant 0 : index
    %c0_9 = arith.constant 0 : index
    %14 = vector.load %arg4[%c0_6, %c0_7, %c0_8, %c0_9] : memref<3x4x1x8xf32, #tpu.memory_space<vmem>>, vector<1x4x1x8xf32>
    %15 = vector.shape_cast %14 : vector<1x4x1x8xf32> to vector<4x1x8xf32>
    %16 = vector.broadcast %15 : vector<4x1x8xf32> to vector<4x8x8xf32>
    %17 = arith.addf %13, %16 : vector<4x8x8xf32>
    %18 = arith.truncf %17 : vector<4x8x8xf32> to vector<4x8x8xbf16>
    %c0_10 = arith.constant 0 : index
    %c0_11 = arith.constant 0 : index
    %c0_12 = arith.constant 0 : index
    %19 = vector.load %arg8[%c0_10, %c0_11, %c0_12] : memref<4x8x8xbf16, #tpu.memory_space<vmem>>, vector<4x8x8xbf16>
    "tpu.trace_start"() <{level = 10 : i32, message = "hqd,hkd->hqk"}> : () -> ()
    %cst_13 = arith.constant dense<0.000000e+00> : vector<4x8x8xf32>
    %20 = tpu.matmul %18, %19, %cst_13 {dimension_numbers = #tpu.dot_dimension_numbers<[2], [2], [1], [1], [0, 0, 0, 1, 1, 1], [0], [0]>} : vector<4x8x8xbf16>, vector<4x8x8xbf16>, vector<4x8x8xf32> -> vector<4x8x8xf32>
    "tpu.trace_stop"() : () -> ()
    %cst_14 = arith.constant dense<0xFF800000> : vector<4x8xf32>
    %21 = vector.multi_reduction <maximumf>, %20, %cst_14 [2] : vector<4x8x8xf32> to vector<4x8xf32>
    %22 = vector.shape_cast %21 : vector<4x8xf32> to vector<4x8x1xf32>
    %23 = vector.broadcast %22 : vector<4x8x1xf32> to vector<4x8x8xf32>
    %24 = arith.subf %20, %23 : vector<4x8x8xf32>
    %25 = math.exp %24 : vector<4x8x8xf32>
    %cst_15 = arith.constant dense<0.000000e+00> : vector<4x8xf32>
    %26 = vector.multi_reduction <add>, %25, %cst_15 [2] : vector<4x8x8xf32> to vector<4x8xf32>
    %27 = vector.shape_cast %26 : vector<4x8xf32> to vector<4x8x1xf32>
    %28 = tpu.reciprocal %27 {approx = true} : vector<4x8x1xf32> -> vector<4x8x1xf32>
    %29 = vector.broadcast %28 : vector<4x8x1xf32> to vector<4x8x8xf32>
    %30 = arith.mulf %25, %29 : vector<4x8x8xf32>
    %31 = arith.truncf %30 : vector<4x8x8xf32> to vector<4x8x8xbf16>
    %c0_16 = arith.constant 0 : index
    %c0_17 = arith.constant 0 : index
    %c0_18 = arith.constant 0 : index
    %32 = vector.load %arg9[%c0_16, %c0_17, %c0_18] : memref<4x8x8xbf16, #tpu.memory_space<vmem>>, vector<4x8x8xbf16>
    "tpu.trace_start"() <{level = 10 : i32, message = "hqk,hkd->hqd"}> : () -> ()
    %cst_19 = arith.constant dense<0.000000e+00> : vector<4x8x8xf32>
    %33 = tpu.matmul %31, %32, %cst_19 {dimension_numbers = #tpu.dot_dimension_numbers<[2], [1], [1], [2], [0, 0, 0, 1, 1, 2], [0], [0]>} : vector<4x8x8xbf16>, vector<4x8x8xbf16>, vector<4x8x8xf32> -> vector<4x8x8xf32>
    "tpu.trace_stop"() : () -> ()
    %34 = arith.truncf %33 : vector<4x8x8xf32> to vector<4x8x8xbf16>
    %c0_20 = arith.constant 0 : index
    %c0_21 = arith.constant 0 : index
    %c0_22 = arith.constant 0 : index
    %35 = vector.load %arg5[%c0_20, %c0_21, %c0_22] : memref<4x8x32xbf16, #tpu.memory_space<vmem>>, vector<4x8x32xbf16>
    "tpu.trace_start"() <{level = 10 : i32, message = "hqd,hdf->hqf"}> : () -> ()
    %cst_23 = arith.constant dense<0.000000e+00> : vector<4x8x32xf32>
    %36 = tpu.matmul %34, %35, %cst_23 {dimension_numbers = #tpu.dot_dimension_numbers<[2], [1], [1], [2], [0, 0, 0, 1, 1, 2], [0], [0]>} : vector<4x8x8xbf16>, vector<4x8x32xbf16>, vector<4x8x32xf32> -> vector<4x8x32xf32>
    "tpu.trace_stop"() : () -> ()
    %cst_24 = arith.constant dense<0.000000e+00> : vector<8x32xf32>
    %37 = vector.multi_reduction <add>, %36, %cst_24 [0] : vector<4x8x32xf32> to vector<8x32xf32>
    %c0_25 = arith.constant 0 : index
    %c0_26 = arith.constant 0 : index
    %38 = vector.load %arg6[%c0_25, %c0_26] : memref<1x32xf32, #tpu.memory_space<vmem>>, vector<1x32xf32>
    %39 = vector.broadcast %38 : vector<1x32xf32> to vector<8x32xf32>
    %40 = arith.addf %37, %39 : vector<8x32xf32>
    %c0_27 = arith.constant 0 : index
    %c0_28 = arith.constant 0 : index
    %c0_29 = arith.constant 0 : index
    %41 = vector.load %arg7[%c0_27, %c0_28, %c0_29] : memref<1x8x32xf32, #tpu.memory_space<vmem>>, vector<1x8x32xf32>
    %42 = vector.shape_cast %41 : vector<1x8x32xf32> to vector<8x32xf32>
    %43 = vector.shape_cast %40 : vector<8x32xf32> to vector<1x8x32xf32>
    tpu.vector_store %arg7[%c0_27, %c0_28, %c0_29], %43 {strides = array<i32>} : memref<1x8x32xf32, #tpu.memory_space<vmem>>, vector<1x8x32xf32>,
    return
  }
  func.func @transform_0(%arg0: i32, %arg1: i32) -> (i32, i32, i32) {
    %c0_i32 = arith.constant 0 : i32
    %c0_i32_0 = arith.constant 0 : i32
    %c0_i32_1 = arith.constant 0 : i32
    return %arg0, %c0_i32, %c0_i32_0 : i32, i32, i32
  }
  func.func @transform_1(%arg0: i32, %arg1: i32) -> (i32, i32, i32, i32) {
    %c0_i32 = arith.constant 0 : i32
    %c0_i32_0 = arith.constant 0 : i32
    %c0_i32_1 = arith.constant 0 : i32
    %c0_i32_2 = arith.constant 0 : i32
    %c0_i32_3 = arith.constant 0 : i32
    return %c0_i32, %c0_i32_0, %c0_i32_1, %c0_i32_2 : i32, i32, i32, i32
  }
  func.func @transform_2(%arg0: i32, %arg1: i32) -> (i32, i32, i32, i32) {
    %c0_i32 = arith.constant 0 : i32
    %c0_i32_0 = arith.constant 0 : i32
    %c0_i32_1 = arith.constant 0 : i32
    %c0_i32_2 = arith.constant 0 : i32
    %c0_i32_3 = arith.constant 0 : i32
    return %c0_i32, %c0_i32_0, %c0_i32_1, %c0_i32_2 : i32, i32, i32, i32
  }
  func.func @transform_3(%arg0: i32, %arg1: i32) -> (i32, i32, i32) {
    %c0_i32 = arith.constant 0 : i32
    %c0_i32_0 = arith.constant 0 : i32
    %c0_i32_1 = arith.constant 0 : i32
    %c0_i32_2 = arith.constant 0 : i32
    return %c0_i32, %c0_i32_0, %c0_i32_1 : i32, i32, i32
  }
  func.func @transform_4(%arg0: i32, %arg1: i32) -> (i32, i32) {
    %c0_i32 = arith.constant 0 : i32
    %c0_i32_0 = arith.constant 0 : i32
    %c0_i32_1 = arith.constant 0 : i32
    return %c0_i32, %c0_i32_0 : i32, i32
  }
  func.func @transform_5(%arg0: i32, %arg1: i32) -> (i32, i32, i32) {
    %c0_i32 = arith.constant 0 : i32
    %c0_i32_0 = arith.constant 0 : i32
    return %arg0, %arg1, %c0_i32 : i32, i32, i32
  }
}

</mosaic_0001>

<llo_original>
// kernel: tpu_custom_call.1
$region0: #{tpu_custom_call.1}
  #allocation0 [shape = 'u32[]', space=smem, size = 0x4, offset = 0x4, fixed_abs, tag = 'smem constant byte address 0x4 - core index']
  #allocation1 [shape = 'u32[144,128]{1,0:T(1,128)}', space=vmem, size = 0x12000, scoped, tag = 'internal scratch']
  #allocation2 [shape = 'bf16[4,8,8]{2,1,0:T(8,128)(2,1)}', space=vmem, size = 0x2000, scoped, tag = 'scratch operand']
  #allocation3 [shape = 'bf16[4,8,8]{2,1,0:T(8,128)(2,1)}', space=vmem, size = 0x2000, scoped, tag = 'scratch operand']
  %s0 = inlined_call_operand.vmem [shape: f32[2,8,32], index: 0, kind: input, shape index: {}]
  %s1 = inlined_call_operand.vmem [shape: bf16[3,4,32,8], index: 1, kind: input, shape index: {}]
  %s2 = inlined_call_operand.vmem [shape: f32[3,4,1,8], index: 2, kind: input, shape index: {}]
  %s3 = inlined_call_operand.vmem [shape: bf16[4,8,32], index: 3, kind: input, shape index: {}]
  %s4 = inlined_call_operand.vmem [shape: f32[1,32], index: 4, kind: input, shape index: {}]
  %s5 = inlined_call_operand.hbm [shape: f32[2,8,32], index: 5, kind: output, shape index: {}]
  %s6 = sld [smem:[#allocation0]]
  $region57: #{tpu_custom_call.1} parent=0
    _
  %s8 = ssub.s32 1, %s6
  %s9 = scalar_select 0, %s8, %s6
  $region1: #{tpu_custom_call.1} parent=0
    #allocation4 [shape = 'u8[8192]{0}', space=vmem, size = 0x2000, scoped, tag = 'output window, operand 0']
    #allocation5 [shape = 's32[2]{0}', space=sflag, size = 0x8, scoped, tag = 'scoped memory for tpu_custom_call.1']
    %10 = vsyncpa [#allocation5], 0
    %s11 = scalar_lea.sflag [#allocation5], 1
    %12 = vsyncpa %s11, 0
    loop: start=0, step=1, limit=4
    $region2: #{tpu_custom_call.1} parent=1 // loop_pre_header
      _
    $region3: #{tpu_custom_call.1} parent=1 // loop_header
      %s14 = sphi 0, %s18
      %p15 = scmp.ge.s32.totalorder %s14, 4
      %s21 = sphi 0, %s33
      %s22 = sphi 0, %s29
      %s23 = sphi 0, %s21
      %s24 = sphi 0, %s22
      %s25 = sphi 0, %s23
      %s26 = sphi 0, %s24
      %s36 = sphi 0, %s38
      %s39 = sphi 0, %s36
      %s40 = sphi 0, %s39
      %s56 = sphi 0, %s40
      %s60 = sphi 0, %s60
      %s62 = sphi 0, %s60
      %s63 = sphi 0, %s62
      %s77 = sphi 0, %s63
      %s81 = sphi 0, %s81
      %s83 = sphi 0, %s81
      %s84 = sphi 0, %s83
      %s98 = sphi 0, %s84
      %s102 = sphi 0, %s102
      %s104 = sphi 0, %s102
      %s105 = sphi 0, %s104
      %s119 = sphi 0, %s105
      %s123 = sphi 0, %s123
      %s125 = sphi 0, %s123
      %s126 = sphi 0, %s125
      %s140 = sphi 0, %s126
      %s148 = sphi 0, %s150
      %s151 = sphi 0, %s148
      %s152 = sphi 0, %s151
      %s168 = sphi 0, %s152
    $region4: #{tpu_custom_call.1} parent=1 // loop_header_branch
      %17 = sbr.rel (%p15) target = $region8
    $region5: #{tpu_custom_call.1} parent=1 // loop_body
      %s19 = ssub.s32 %s14, 1
      %s20 = ssub.s32 %s14, 2
      %s27 = sadd.s32 1, %s22
      %p28 = scmp.ge.s32.totalorder %s27, 1
      %s29 = scalar_select %p28, 0, %s27
      %s30 = sadd.s32 1, %s21
      %s31 = scalar_select %p28, %s30, %s21
      %p32 = scmp.ge.s32.totalorder %s31, 2
      %s33 = scalar_select %p32, 0, %s31
      %s34 = ssub.s32 %s21, %s33
      %p35 = scmp.eq.s32.totalorder %s34, 0
      %s37 = sadd.s32 %s36, 1
      %s38 = scalar_select %p35, %s36, %s37
      %p41 = pneg %p35
      %p42 = scmp.eq.s32.totalorder %s14, 1
      %p43 = por %p41, %p42
      %p44 = scmp.ne.s32.totalorder %s36, %s39
      %p45 = scmp.eq.s32.totalorder %s14, 0
      %p46 = por %p44, %p45
      %p47 = scmp.ne.s32.totalorder %s36, %s39
      %p48 = scmp.eq.s32.totalorder %s19, 1
      %p49 = por %p47, %p48
      %p50 = scmp.ne.s32.totalorder %s39, %s40
      %p51 = scmp.eq.s32.totalorder %s19, 0
      %p52 = por %p50, %p51
      %p53 = scmp.ne.s32.totalorder %s39, %s40
      %p54 = scmp.eq.s32.totalorder %s20, 1
      %p55 = por %p53, %p54
      %p57 = scmp.ne.s32.totalorder %s40, %s56
      %p58 = scmp.eq.s32.totalorder %s20, 0
      %p59 = por %p57, %p58
      %s61 = sadd.s32 %s60, 1
      %p64 = scmp.eq.s32.totalorder %s14, 1
      %p65 = scmp.ne.s32.totalorder %s60, %s62
      %p66 = scmp.eq.s32.totalorder %s14, 0
      %p67 = por %p65, %p66
      %p68 = scmp.ne.s32.totalorder %s60, %s62
      %p69 = scmp.eq.s32.totalorder %s19, 1
      %p70 = por %p68, %p69
      %p71 = scmp.ne.s32.totalorder %s62, %s63
      %p72 = scmp.eq.s32.totalorder %s19, 0
      %p73 = por %p71, %p72
      %p74 = scmp.ne.s32.totalorder %s62, %s63
      %p75 = scmp.eq.s32.totalorder %s20, 1
      %p76 = por %p74, %p75
      %p78 = scmp.ne.s32.totalorder %s63, %s77
      %p79 = scmp.eq.s32.totalorder %s20, 0
      %p80 = por %p78, %p79
      %s82 = sadd.s32 %s81, 1
      %p85 = scmp.eq.s32.totalorder %s14, 1
      %p86 = scmp.ne.s32.totalorder %s81, %s83
      %p87 = scmp.eq.s32.totalorder %s14, 0
      %p88 = por %p86, %p87
      %p89 = scmp.ne.s32.totalorder %s81, %s83
      %p90 = scmp.eq.s32.totalorder %s19, 1
      %p91 = por %p89, %p90
      %p92 = scmp.ne.s32.totalorder %s83, %s84
      %p93 = scmp.eq.s32.totalorder %s19, 0
      %p94 = por %p92, %p93
      %p95 = scmp.ne.s32.totalorder %s83, %s84
      %p96 = scmp.eq.s32.totalorder %s20, 1
      %p97 = por %p95, %p96
      %p99 = scmp.ne.s32.totalorder %s84, %s98
      %p100 = scmp.eq.s32.totalorder %s20, 0
      %p101 = por %p99, %p100
      %s103 = sadd.s32 %s102, 1
      %p106 = scmp.eq.s32.totalorder %s14, 1
      %p107 = scmp.ne.s32.totalorder %s102, %s104
      %p108 = scmp.eq.s32.totalorder %s14, 0
      %p109 = por %p107, %p108
      %p110 = scmp.ne.s32.totalorder %s102, %s104
      %p111 = scmp.eq.s32.totalorder %s19, 1
      %p112 = por %p110, %p111
      %p113 = scmp.ne.s32.totalorder %s104, %s105
      %p114 = scmp.eq.s32.totalorder %s19, 0
      %p115 = por %p113, %p114
      %p116 = scmp.ne.s32.totalorder %s104, %s105
      %p117 = scmp.eq.s32.totalorder %s20, 1
      %p118 = por %p116, %p117
      %p120 = scmp.ne.s32.totalorder %s105, %s119
      %p121 = scmp.eq.s32.totalorder %s20, 0
      %p122 = por %p120, %p121
      %s124 = sadd.s32 %s123, 1
      %p127 = scmp.eq.s32.totalorder %s14, 1
      %p128 = scmp.ne.s32.totalorder %s123, %s125
      %p129 = scmp.eq.s32.totalorder %s14, 0
      %p130 = por %p128, %p129
      %p131 = scmp.ne.s32.totalorder %s123, %s125
      %p132 = scmp.eq.s32.totalorder %s19, 1
      %p133 = por %p131, %p132
      %p134 = scmp.ne.s32.totalorder %s125, %s126
      %p135 = scmp.eq.s32.totalorder %s19, 0
      %p136 = por %p134, %p135
      %p137 = scmp.ne.s32.totalorder %s125, %s126
      %p138 = scmp.eq.s32.totalorder %s20, 1
      %p139 = por %p137, %p138
      %p141 = scmp.ne.s32.totalorder %s126, %s140
      %p142 = scmp.eq.s32.totalorder %s20, 0
      %p143 = por %p141, %p142
      %s144 = ssub.s32 %s21, %s33
      %s145 = ssub.s32 %s22, %s29
      %s146 = sor.u32 %s144, %s145
      %p147 = scmp.eq.s32.totalorder %s146, 0
      %s149 = sadd.s32 %s148, 1
      %s150 = scalar_select %p147, %s148, %s149
      %p153 = pneg %p147
      %p154 = scmp.eq.s32.totalorder %s14, 1
      %p155 = por %p153, %p154
      %p156 = scmp.ne.s32.totalorder %s148, %s151
      %p157 = scmp.eq.s32.totalorder %s14, 0
      %p158 = por %p156, %p157
      %p159 = scmp.ne.s32.totalorder %s148, %s151
      %p160 = scmp.eq.s32.totalorder %s19, 1
      %p161 = por %p159, %p160
      %p162 = scmp.ne.s32.totalorder %s151, %s152
      %p163 = scmp.eq.s32.totalorder %s19, 0
      %p164 = por %p162, %p163
      %p165 = scmp.ne.s32.totalorder %s151, %s152
      %p166 = scmp.eq.s32.totalorder %s20, 1
      %p167 = por %p165, %p166
      %p169 = scmp.ne.s32.totalorder %s152, %s168
      %p170 = scmp.eq.s32.totalorder %s20, 0
      %p171 = por %p169, %p170
      %p172 = scmp.le.s32.totalorder 1, %s14
      %p173 = scmp.lt.s32.totalorder %s14, 3
      %p174 = pnand %p172, %p173
      %p175 = pneg %p174
      // Predicated region
      $region9: #{tpu_custom_call.1} parent=5 // pred_check
        _
      $region10: #{tpu_custom_call.1} parent=5 // pred_check_branch
        %177 = sbr.rel (%p174) target = $region12
      $region11: #{tpu_custom_call.1} parent=5 // pred_region
        %s178 = ssub.s32 %s14, 1
        // Predicated region
        $region13: #{tpu_custom_call.1} parent=11 // pred_check
          %p179 = pneg %p73
        $region14: #{tpu_custom_call.1} parent=11 // pred_check_branch
          %181 = sbr.rel (%p179) target = $region16
        $region15: #{tpu_custom_call.1} parent=11 // pred_region
          _
        $region16: #{tpu_custom_call.1} parent=11 // pred_fallthru
          _
        // Predicated region
        $region17: #{tpu_custom_call.1} parent=11 // pred_check
          %p182 = pneg %p94
        $region18: #{tpu_custom_call.1} parent=11 // pred_check_branch
          %184 = sbr.rel (%p182) target = $region20
        $region19: #{tpu_custom_call.1} parent=11 // pred_region
          _
        $region20: #{tpu_custom_call.1} parent=11 // pred_fallthru
          _
        // Predicated region
        $region21: #{tpu_custom_call.1} parent=11 // pred_check
          %p185 = pneg %p115
        $region22: #{tpu_custom_call.1} parent=11 // pred_check_branch
          %187 = sbr.rel (%p185) target = $region24
        $region23: #{tpu_custom_call.1} parent=11 // pred_region
          _
        $region24: #{tpu_custom_call.1} parent=11 // pred_fallthru
          _
        // Predicated region
        $region25: #{tpu_custom_call.1} parent=11 // pred_check
          %p188 = pneg %p136
        $region26: #{tpu_custom_call.1} parent=11 // pred_check_branch
          %190 = sbr.rel (%p188) target = $region28
        $region27: #{tpu_custom_call.1} parent=11 // pred_region
          _
        $region28: #{tpu_custom_call.1} parent=11 // pred_fallthru
          _
      $region12: #{tpu_custom_call.1} parent=5 // pred_fallthru
        _
      %p191 = scmp.lt.s32.totalorder %s14, 2
      // Predicated region
      $region29: #{tpu_custom_call.1} parent=5 // pred_check
        %p192 = pneg %p191
      $region30: #{tpu_custom_call.1} parent=5 // pred_check_branch
        %194 = sbr.rel (%p192) target = $region32
      $region31: #{tpu_custom_call.1} parent=5 // pred_region
        // Predicated region
        $region33: #{tpu_custom_call.1} parent=31 // pred_check
          %p195 = pneg %p46
        $region34: #{tpu_custom_call.1} parent=31 // pred_check_branch
          %197 = sbr.rel (%p195) target = $region36
        $region35: #{tpu_custom_call.1} parent=31 // pred_region
          %p198 = scmp.lt.s32.totalorder %s21, 1
          %s199 = scalar_select %p198, %s21, 1
          %s200 = smul.addr %s199, 8
          %s201 = scalar_lea.vmem %s0, %s200
        $region36: #{tpu_custom_call.1} parent=31 // pred_fallthru
          _
      $region32: #{tpu_custom_call.1} parent=5 // pred_fallthru
        _
      %p202 = scmp.le.s32.totalorder 1, %s14
      %p203 = scmp.lt.s32.totalorder %s14, 3
      %p204 = pnand %p202, %p203
      %p205 = pneg %p204
      // Predicated region
      $region37: #{tpu_custom_call.1} parent=5 // pred_check
        _
      $region38: #{tpu_custom_call.1} parent=5 // pred_check_branch
        %207 = sbr.rel (%p204) target = $region40
      $region39: #{tpu_custom_call.1} parent=5 // pred_region
        %s208 = ssub.s32 %s14, 1
        %p209 = scmp.lt.s32.totalorder %s23, 1
        %s210 = scalar_select %p209, %s23, 1
        %s211 = smul.addr %s210, 8
        %s212 = scalar_lea.vmem %s0, %s211
        %p213 = pneg %p52
        %p214 = pneg %p49
        %p215 = pneg %p73
        %p216 = pneg %p70
        %p217 = pneg %p94
        %p218 = pneg %p91
        %p219 = pneg %p115
        %p220 = pneg %p112
        %p221 = pneg %p136
        %p222 = pneg %p133
        %p223 = pneg %p164
        %p224 = pneg %p161
        %s225 = sand.u32 %s151, 1
        %s226 = scalar_lea.sflag [#allocation5], %s225
        %s227 = sand.u32 %s151, 1
        %s228 = smul.addr %s227, 8
        %s229 = scalar_lea.vmem [#allocation4], %s228
        %p230 = scmp.lt.s32.totalorder %s23, 1
        %s231 = scalar_select %p230, %s23, 1
        %s232 = smul.addr %s231, 8
        %s233 = scalar_lea.vmem %s0, %s232
        %p235 = scmp.eq.s32.totalorder %s24, 0
        // Predicated region
        $region41: #{tpu_custom_call.1} parent=39 // pred_check
          %p236 = pneg %p235
        $region42: #{tpu_custom_call.1} parent=39 // pred_check_branch
          %238 = sbr.rel (%p236) target = $region44
        $region43: #{tpu_custom_call.1} parent=39 // pred_region
          %v239 = vld [vmem:[%s233] sm:$0xff]
          %v240 = vpack.c.bf16 %v239, %v239
          %s241 = scalar_lea.vmem %s1, 64
          %v242 = vld [vmem:[%s241] sm:$0xf]
          %v243 = vld [vmem:[%s241 + $0x4] sm:$0xf]
          %v244 = vld [vmem:[%s241 + $0x8] sm:$0xf]
          %v245 = vld [vmem:[%s241 + $0xc] sm:$0xf]
          %v246 = vld [vmem:[%s241 + $0x10] sm:$0xf]
          %v247 = vld [vmem:[%s241 + $0x14] sm:$0xf]
          %v248 = vld [vmem:[%s241 + $0x18] sm:$0xf]
          %v249 = vld [vmem:[%s241 + $0x1c] sm:$0xf]
          %v250 = vld [vmem:[%s241 + $0x20] sm:$0xf]
          %v251 = vld [vmem:[%s241 + $0x24] sm:$0xf]
          %v252 = vld [vmem:[%s241 + $0x28] sm:$0xf]
          %v253 = vld [vmem:[%s241 + $0x2c] sm:$0xf]
          %v254 = vld [vmem:[%s241 + $0x30] sm:$0xf]
          %v255 = vld [vmem:[%s241 + $0x34] sm:$0xf]
          %v256 = vld [vmem:[%s241 + $0x38] sm:$0xf]
          %v257 = vld [vmem:[%s241 + $0x3c] sm:$0xf]
          %s258 = scalar_lea.vmem %s2, 4
          %v259 = vld [vmem:[%s258] sm:$0x1]
          %v260 = vld [vmem:[%s258 + $0x1] sm:$0x1]
          %v261 = vld [vmem:[%s258 + $0x2] sm:$0x1]
          %v262 = vld [vmem:[%s258 + $0x3] sm:$0x1]
          %v267 = vlaneseq
          %v268 = vshrl.u32 %v267, 7
          %v269 = vsub.s32 0, %v268
          %v270 = vrot.slane %v259, %v269
          %v271 = vlaneseq
          %v272 = vshrl.u32 %v271, 7
          %v273 = vsub.s32 0, %v272
          %v274 = vrot.slane %v260, %v273
          %v275 = vlaneseq
          %v276 = vshrl.u32 %v275, 7
          %v277 = vsub.s32 0, %v276
          %v278 = vrot.slane %v261, %v277
          %v279 = vlaneseq
          %v280 = vshrl.u32 %v279, 7
          %v281 = vsub.s32 0, %v280
          %v282 = vrot.slane %v262, %v281
          %v291 = vunpack.c.l.b16 %v242
          %v292 = vunpack.c.l.b16 %v243
          %v293 = vunpack.c.l.b16 %v244
          %v294 = vunpack.c.l.b16 %v245
          %v295 = vpack.c.b16 %v292, %v291
          %v296 = vpack.c.b16 %v294, %v293
          %vm299 = vcmask 261120
          %v301 = vsel %vm299, %v240, 0
          %303 = vmatprep.subr.bf16.mxu0 0
          %304 = vmatpush1.bf16.msra.mxu0 %v295
          %305 = vmatprep.subr.bf16.mxu0 0
          %306 = vmatpush1.bf16.msra.mxu0 %v296
          %307 = vmatprep.subr.bf16.mxu0 0
          %308 = vmatpush1.bf16.msra.mxu0 0
          %309 = vmatprep.subr.bf16.mxu0 0
          %310 = vmatpush1.bf16.msra.mxu0 0
          %311 = vmatprep.subr.bf16.mxu0 0
          %312 = vmatpush1.bf16.msra.mxu0 0
          %313 = vmatprep.subr.bf16.mxu0 0
          %314 = vmatpush1.bf16.msra.mxu0 0
          %315 = vmatprep.subr.bf16.mxu0 0
          %316 = vmatpush1.bf16.msra.mxu0 0
          %317 = vmatprep.subr.bf16.mxu0 0
          %318 = vmatpush1.bf16.msra.mxu0 0
          %319 = vmatprep.subr.bf16.mxu0 0
          %320 = vmatpush1.bf16.msra.mxu0 0
          %321 = vmatprep.subr.bf16.mxu0 0
          %322 = vmatpush1.bf16.msra.mxu0 0
          %323 = vmatprep.subr.bf16.mxu0 0
          %324 = vmatpush1.bf16.msra.mxu0 0
          %325 = vmatprep.subr.bf16.mxu0 0
          %326 = vmatpush1.bf16.msra.mxu0 0
          %327 = vmatprep.subr.bf16.mxu0 0
          %328 = vmatpush1.bf16.msra.mxu0 0
          %329 = vmatprep.subr.bf16.mxu0 0
          %330 = vmatpush1.bf16.msra.mxu0 0
          %331 = vmatprep.subr.bf16.mxu0 0
          %332 = vmatpush1.bf16.msra.mxu0 0
          %333 = vmatprep.subr.bf16.mxu0 0
          %334 = vmatpush1.bf16.msra.mxu0 0
          %335 = vmatprep.mubr.bf16.mxu0 0
          %336 = vmatmul.mubr.bf16.gmra.mrb[0].mxu0 %v301
          %v337 = vpop.f32.mrb[0].mxu0
          %v338 = vadd.f32 %v270, %v337
          %v339 = vpop.f32.mrb[0].mxu0
          %v340 = vpop.f32.mrb[0].mxu0
          %v341 = vpop.f32.mrb[0].mxu0
          %342 = vdwg.mxu0
          %v347 = vunpack.c.l.b16 %v246
          %v348 = vunpack.c.l.b16 %v247
          %v349 = vunpack.c.l.b16 %v248
          %v350 = vunpack.c.l.b16 %v249
          %v351 = vpack.c.b16 %v348, %v347
          %v352 = vpack.c.b16 %v350, %v349
          %355 = vmatprep.subr.bf16.mxu0 0
          %356 = vmatpush1.bf16.msra.mxu0 %v351
          %357 = vmatprep.subr.bf16.mxu0 0
          %358 = vmatpush1.bf16.msra.mxu0 %v352
          %359 = vmatprep.subr.bf16.mxu0 0
          %360 = vmatpush1.bf16.msra.mxu0 0
          %361 = vmatprep.subr.bf16.mxu0 0
          %362 = vmatpush1.bf16.msra.mxu0 0
          %363 = vmatprep.subr.bf16.mxu0 0
          %364 = vmatpush1.bf16.msra.mxu0 0
          %365 = vmatprep.subr.bf16.mxu0 0
          %366 = vmatpush1.bf16.msra.mxu0 0
          %367 = vmatprep.subr.bf16.mxu0 0
          %368 = vmatpush1.bf16.msra.mxu0 0
          %369 = vmatprep.subr.bf16.mxu0 0
          %370 = vmatpush1.bf16.msra.mxu0 0
          %371 = vmatprep.subr.bf16.mxu0 0
          %372 = vmatpush1.bf16.msra.mxu0 0
          %373 = vmatprep.subr.bf16.mxu0 0
          %374 = vmatpush1.bf16.msra.mxu0 0
          %375 = vmatprep.subr.bf16.mxu0 0
          %376 = vmatpush1.bf16.msra.mxu0 0
          %377 = vmatprep.subr.bf16.mxu0 0
          %378 = vmatpush1.bf16.msra.mxu0 0
          %379 = vmatprep.subr.bf16.mxu0 0
          %380 = vmatpush1.bf16.msra.mxu0 0
          %381 = vmatprep.subr.bf16.mxu0 0
          %382 = vmatpush1.bf16.msra.mxu0 0
          %383 = vmatprep.subr.bf16.mxu0 0
          %384 = vmatpush1.bf16.msra.mxu0 0
          %385 = vmatprep.subr.bf16.mxu0 0
          %386 = vmatpush1.bf16.msra.mxu0 0
          %387 = vmatprep.mubr.bf16.mxu0 0
          %388 = vmatmul.mubr.bf16.gmra.mrb[0].mxu0 %v301
          %v389 = vpop.f32.mrb[0].mxu0
          %v390 = vadd.f32 %v274, %v389
          %v391 = vpop.f32.mrb[0].mxu0
          %v392 = vpop.f32.mrb[0].mxu0
          %v393 = vpop.f32.mrb[0].mxu0
          %394 = vdwg.mxu0
          %v399 = vunpack.c.l.b16 %v250
          %v400 = vunpack.c.l.b16 %v251
          %v401 = vunpack.c.l.b16 %v252
          %v402 = vunpack.c.l.b16 %v253
          %v403 = vpack.c.b16 %v400, %v399
          %v404 = vpack.c.b16 %v402, %v401
          %407 = vmatprep.subr.bf16.mxu0 0
          %408 = vmatpush1.bf16.msra.mxu0 %v403
          %409 = vmatprep.subr.bf16.mxu0 0
          %410 = vmatpush1.bf16.msra.mxu0 %v404
          %411 = vmatprep.subr.bf16.mxu0 0
          %412 = vmatpush1.bf16.msra.mxu0 0
          %413 = vmatprep.subr.bf16.mxu0 0
          %414 = vmatpush1.bf16.msra.mxu0 0
          %415 = vmatprep.subr.bf16.mxu0 0
          %416 = vmatpush1.bf16.msra.mxu0 0
          %417 = vmatprep.subr.bf16.mxu0 0
          %418 = vmatpush1.bf16.msra.mxu0 0
          %419 = vmatprep.subr.bf16.mxu0 0
          %420 = vmatpush1.bf16.msra.mxu0 0
          %421 = vmatprep.subr.bf16.mxu0 0
          %422 = vmatpush1.bf16.msra.mxu0 0
          %423 = vmatprep.subr.bf16.mxu0 0
          %424 = vmatpush1.bf16.msra.mxu0 0
          %425 = vmatprep.subr.bf16.mxu0 0
          %426 = vmatpush1.bf16.msra.mxu0 0
          %427 = vmatprep.subr.bf16.mxu0 0
          %428 = vmatpush1.bf16.msra.mxu0 0
          %429 = vmatprep.subr.bf16.mxu0 0
          %430 = vmatpush1.bf16.msra.mxu0 0
          %431 = vmatprep.subr.bf16.mxu0 0
          %432 = vmatpush1.bf16.msra.mxu0 0
          %433 = vmatprep.subr.bf16.mxu0 0
          %434 = vmatpush1.bf16.msra.mxu0 0
          %435 = vmatprep.subr.bf16.mxu0 0
          %436 = vmatpush1.bf16.msra.mxu0 0
          %437 = vmatprep.subr.bf16.mxu0 0
          %438 = vmatpush1.bf16.msra.mxu0 0
          %439 = vmatprep.mubr.bf16.mxu0 0
          %440 = vmatmul.mubr.bf16.gmra.mrb[0].mxu0 %v301
          %v441 = vpop.f32.mrb[0].mxu0
          %v442 = vadd.f32 %v278, %v441
          %v443 = vpop.f32.mrb[0].mxu0
          %v444 = vpop.f32.mrb[0].mxu0
          %v445 = vpop.f32.mrb[0].mxu0
          %446 = vdwg.mxu0
          %v451 = vunpack.c.l.b16 %v254
          %v452 = vunpack.c.l.b16 %v255
          %v453 = vunpack.c.l.b16 %v256
          %v454 = vunpack.c.l.b16 %v257
          %v455 = vpack.c.b16 %v452, %v451
          %v456 = vpack.c.b16 %v454, %v453
          %459 = vmatprep.subr.bf16.mxu0 0
          %460 = vmatpush1.bf16.msra.mxu0 %v455
          %461 = vmatprep.subr.bf16.mxu0 0
          %462 = vmatpush1.bf16.msra.mxu0 %v456
          %463 = vmatprep.subr.bf16.mxu0 0
          %464 = vmatpush1.bf16.msra.mxu0 0
          %465 = vmatprep.subr.bf16.mxu0 0
          %466 = vmatpush1.bf16.msra.mxu0 0
          %467 = vmatprep.subr.bf16.mxu0 0
          %468 = vmatpush1.bf16.msra.mxu0 0
          %469 = vmatprep.subr.bf16.mxu0 0
          %470 = vmatpush1.bf16.msra.mxu0 0
          %471 = vmatprep.subr.bf16.mxu0 0
          %472 = vmatpush1.bf16.msra.mxu0 0
          %473 = vmatprep.subr.bf16.mxu0 0
          %474 = vmatpush1.bf16.msra.mxu0 0
          %475 = vmatprep.subr.bf16.mxu0 0
          %476 = vmatpush1.bf16.msra.mxu0 0
          %477 = vmatprep.subr.bf16.mxu0 0
          %478 = vmatpush1.bf16.msra.mxu0 0
          %479 = vmatprep.subr.bf16.mxu0 0
          %480 = vmatpush1.bf16.msra.mxu0 0
          %481 = vmatprep.subr.bf16.mxu0 0
          %482 = vmatpush1.bf16.msra.mxu0 0
          %483 = vmatprep.subr.bf16.mxu0 0
          %484 = vmatpush1.bf16.msra.mxu0 0
          %485 = vmatprep.subr.bf16.mxu0 0
          %486 = vmatpush1.bf16.msra.mxu0 0
          %487 = vmatprep.subr.bf16.mxu0 0
          %488 = vmatpush1.bf16.msra.mxu0 0
          %489 = vmatprep.subr.bf16.mxu0 0
          %490 = vmatpush1.bf16.msra.mxu0 0
          %491 = vmatprep.mubr.bf16.mxu0 0
          %492 = vmatmul.mubr.bf16.gmra.mrb[0].mxu0 %v301
          %v493 = vpop.f32.mrb[0].mxu0
          %v494 = vadd.f32 %v282, %v493
          %v495 = vpop.f32.mrb[0].mxu0
          %v496 = vpop.f32.mrb[0].mxu0
          %v497 = vpop.f32.mrb[0].mxu0
          %498 = vdwg.mxu0
          %s499 = scalar_lea.vmem %s1, 128
          %v500 = vld [vmem:[%s499] sm:$0xf]
          %v501 = vld [vmem:[%s499 + $0x4] sm:$0xf]
          %v502 = vld [vmem:[%s499 + $0x8] sm:$0xf]
          %v503 = vld [vmem:[%s499 + $0xc] sm:$0xf]
          %v504 = vld [vmem:[%s499 + $0x10] sm:$0xf]
          %v505 = vld [vmem:[%s499 + $0x14] sm:$0xf]
          %v506 = vld [vmem:[%s499 + $0x18] sm:$0xf]
          %v507 = vld [vmem:[%s499 + $0x1c] sm:$0xf]
          %v508 = vld [vmem:[%s499 + $0x20] sm:$0xf]
          %v509 = vld [vmem:[%s499 + $0x24] sm:$0xf]
          %v510 = vld [vmem:[%s499 + $0x28] sm:$0xf]
          %v511 = vld [vmem:[%s499 + $0x2c] sm:$0xf]
          %v512 = vld [vmem:[%s499 + $0x30] sm:$0xf]
          %v513 = vld [vmem:[%s499 + $0x34] sm:$0xf]
          %v514 = vld [vmem:[%s499 + $0x38] sm:$0xf]
          %v515 = vld [vmem:[%s499 + $0x3c] sm:$0xf]
          %s516 = scalar_lea.vmem %s2, 8
          %v517 = vld [vmem:[%s516] sm:$0x1]
          %v518 = vld [vmem:[%s516 + $0x1] sm:$0x1]
          %v519 = vld [vmem:[%s516 + $0x2] sm:$0x1]
          %v520 = vld [vmem:[%s516 + $0x3] sm:$0x1]
          %v525 = vlaneseq
          %v526 = vshrl.u32 %v525, 7
          %v527 = vsub.s32 0, %v526
          %v528 = vrot.slane %v517, %v527
          %v529 = vlaneseq
          %v530 = vshrl.u32 %v529, 7
          %v531 = vsub.s32 0, %v530
          %v532 = vrot.slane %v518, %v531
          %v533 = vlaneseq
          %v534 = vshrl.u32 %v533, 7
          %v535 = vsub.s32 0, %v534
          %v536 = vrot.slane %v519, %v535
          %v537 = vlaneseq
          %v538 = vshrl.u32 %v537, 7
          %v539 = vsub.s32 0, %v538
          %v540 = vrot.slane %v520, %v539
          %v549 = vunpack.c.l.b16 %v500
          %v550 = vunpack.c.l.b16 %v501
          %v551 = vunpack.c.l.b16 %v502
          %v552 = vunpack.c.l.b16 %v503
          %v553 = vpack.c.b16 %v550, %v549
          %v554 = vpack.c.b16 %v552, %v551
          %557 = vmatprep.subr.bf16.mxu0 0
          %558 = vmatpush1.bf16.msra.mxu0 %v553
          %559 = vmatprep.subr.bf16.mxu0 0
          %560 = vmatpush1.bf16.msra.mxu0 %v554
          %561 = vmatprep.subr.bf16.mxu0 0
          %562 = vmatpush1.bf16.msra.mxu0 0
          %563 = vmatprep.subr.bf16.mxu0 0
          %564 = vmatpush1.bf16.msra.mxu0 0
          %565 = vmatprep.subr.bf16.mxu0 0
          %566 = vmatpush1.bf16.msra.mxu0 0
          %567 = vmatprep.subr.bf16.mxu0 0
          %568 = vmatpush1.bf16.msra.mxu0 0
          %569 = vmatprep.subr.bf16.mxu0 0
          %570 = vmatpush1.bf16.msra.mxu0 0
          %571 = vmatprep.subr.bf16.mxu0 0
          %572 = vmatpush1.bf16.msra.mxu0 0
          %573 = vmatprep.subr.bf16.mxu0 0
          %574 = vmatpush1.bf16.msra.mxu0 0
          %575 = vmatprep.subr.bf16.mxu0 0
          %576 = vmatpush1.bf16.msra.mxu0 0
          %577 = vmatprep.subr.bf16.mxu0 0
          %578 = vmatpush1.bf16.msra.mxu0 0
          %579 = vmatprep.subr.bf16.mxu0 0
          %580 = vmatpush1.bf16.msra.mxu0 0
          %581 = vmatprep.subr.bf16.mxu0 0
          %582 = vmatpush1.bf16.msra.mxu0 0
          %583 = vmatprep.subr.bf16.mxu0 0
          %584 = vmatpush1.bf16.msra.mxu0 0
          %585 = vmatprep.subr.bf16.mxu0 0
          %586 = vmatpush1.bf16.msra.mxu0 0
          %587 = vmatprep.subr.bf16.mxu0 0
          %588 = vmatpush1.bf16.msra.mxu0 0
          %589 = vmatprep.mubr.bf16.mxu0 0
          %590 = vmatmul.mubr.bf16.gmra.mrb[0].mxu0 %v301
          %v591 = vpop.f32.mrb[0].mxu0
          %v592 = vadd.f32 %v528, %v591
          %v593 = vpop.f32.mrb[0].mxu0
          %v594 = vpop.f32.mrb[0].mxu0
          %v595 = vpop.f32.mrb[0].mxu0
          %596 = vdwg.mxu0
          %v601 = vunpack.c.l.b16 %v504
          %v602 = vunpack.c.l.b16 %v505
          %v603 = vunpack.c.l.b16 %v506
          %v604 = vunpack.c.l.b16 %v507
          %v605 = vpack.c.b16 %v602, %v601
          %v606 = vpack.c.b16 %v604, %v603
          %609 = vmatprep.subr.bf16.mxu0 0
          %610 = vmatpush1.bf16.msra.mxu0 %v605
          %611 = vmatprep.subr.bf16.mxu0 0
          %612 = vmatpush1.bf16.msra.mxu0 %v606
          %613 = vmatprep.subr.bf16.mxu0 0
          %614 = vmatpush1.bf16.msra.mxu0 0
          %615 = vmatprep.subr.bf16.mxu0 0
          %616 = vmatpush1.bf16.msra.mxu0 0
          %617 = vmatprep.subr.bf16.mxu0 0
          %618 = vmatpush1.bf16.msra.mxu0 0
          %619 = vmatprep.subr.bf16.mxu0 0
          %620 = vmatpush1.bf16.msra.mxu0 0
          %621 = vmatprep.subr.bf16.mxu0 0
          %622 = vmatpush1.bf16.msra.mxu0 0
          %623 = vmatprep.subr.bf16.mxu0 0
          %624 = vmatpush1.bf16.msra.mxu0 0
          %625 = vmatprep.subr.bf16.mxu0 0
          %626 = vmatpush1.bf16.msra.mxu0 0
          %627 = vmatprep.subr.bf16.mxu0 0
          %628 = vmatpush1.bf16.msra.mxu0 0
          %629 = vmatprep.subr.bf16.mxu0 0
          %630 = vmatpush1.bf16.msra.mxu0 0
          %631 = vmatprep.subr.bf16.mxu0 0
          %632 = vmatpush1.bf16.msra.mxu0 0
          %633 = vmatprep.subr.bf16.mxu0 0
          %634 = vmatpush1.bf16.msra.mxu0 0
          %635 = vmatprep.subr.bf16.mxu0 0
          %636 = vmatpush1.bf16.msra.mxu0 0
          %637 = vmatprep.subr.bf16.mxu0 0
          %638 = vmatpush1.bf16.msra.mxu0 0
          %639 = vmatprep.subr.bf16.mxu0 0
          %640 = vmatpush1.bf16.msra.mxu0 0
          %641 = vmatprep.mubr.bf16.mxu0 0
          %642 = vmatmul.mubr.bf16.gmra.mrb[0].mxu0 %v301
          %v643 = vpop.f32.mrb[0].mxu0
          %v644 = vadd.f32 %v532, %v643
          %v645 = vpop.f32.mrb[0].mxu0
          %v646 = vpop.f32.mrb[0].mxu0
          %v647 = vpop.f32.mrb[0].mxu0
          %648 = vdwg.mxu0
          %v653 = vunpack.c.l.b16 %v508
          %v654 = vunpack.c.l.b16 %v509
          %v655 = vunpack.c.l.b16 %v510
          %v656 = vunpack.c.l.b16 %v511
          %v657 = vpack.c.b16 %v654, %v653
          %v658 = vpack.c.b16 %v656, %v655
          %661 = vmatprep.subr.bf16.mxu0 0
          %662 = vmatpush1.bf16.msra.mxu0 %v657
          %663 = vmatprep.subr.bf16.mxu0 0
          %664 = vmatpush1.bf16.msra.mxu0 %v658
          %665 = vmatprep.subr.bf16.mxu0 0
          %666 = vmatpush1.bf16.msra.mxu0 0
          %667 = vmatprep.subr.bf16.mxu0 0
          %668 = vmatpush1.bf16.msra.mxu0 0
          %669 = vmatprep.subr.bf16.mxu0 0
          %670 = vmatpush1.bf16.msra.mxu0 0
          %671 = vmatprep.subr.bf16.mxu0 0
          %672 = vmatpush1.bf16.msra.mxu0 0
          %673 = vmatprep.subr.bf16.mxu0 0
          %674 = vmatpush1.bf16.msra.mxu0 0
          %675 = vmatprep.subr.bf16.mxu0 0
          %676 = vmatpush1.bf16.msra.mxu0 0
          %677 = vmatprep.subr.bf16.mxu0 0
          %678 = vmatpush1.bf16.msra.mxu0 0
          %679 = vmatprep.subr.bf16.mxu0 0
          %680 = vmatpush1.bf16.msra.mxu0 0
          %681 = vmatprep.subr.bf16.mxu0 0
          %682 = vmatpush1.bf16.msra.mxu0 0
          %683 = vmatprep.subr.bf16.mxu0 0
          %684 = vmatpush1.bf16.msra.mxu0 0
          %685 = vmatprep.subr.bf16.mxu0 0
          %686 = vmatpush1.bf16.msra.mxu0 0
          %687 = vmatprep.subr.bf16.mxu0 0
          %688 = vmatpush1.bf16.msra.mxu0 0
          %689 = vmatprep.subr.bf16.mxu0 0
          %690 = vmatpush1.bf16.msra.mxu0 0
          %691 = vmatprep.subr.bf16.mxu0 0
          %692 = vmatpush1.bf16.msra.mxu0 0
          %693 = vmatprep.mubr.bf16.mxu0 0
          %694 = vmatmul.mubr.bf16.gmra.mrb[0].mxu0 %v301
          %v695 = vpop.f32.mrb[0].mxu0
          %v696 = vadd.f32 %v536, %v695
          %v697 = vpop.f32.mrb[0].mxu0
          %v698 = vpop.f32.mrb[0].mxu0
          %v699 = vpop.f32.mrb[0].mxu0
          %700 = vdwg.mxu0
          %v705 = vunpack.c.l.b16 %v512
          %v706 = vunpack.c.l.b16 %v513
          %v707 = vunpack.c.l.b16 %v514
          %v708 = vunpack.c.l.b16 %v515
          %v709 = vpack.c.b16 %v706, %v705
          %v710 = vpack.c.b16 %v708, %v707
          %713 = vmatprep.subr.bf16.mxu0 0
          %714 = vmatpush1.bf16.msra.mxu0 %v709
          %715 = vmatprep.subr.bf16.mxu0 0
          %716 = vmatpush1.bf16.msra.mxu0 %v710
          %717 = vmatprep.subr.bf16.mxu0 0
          %718 = vmatpush1.bf16.msra.mxu0 0
          %719 = vmatprep.subr.bf16.mxu0 0
          %720 = vmatpush1.bf16.msra.mxu0 0
          %721 = vmatprep.subr.bf16.mxu0 0
          %722 = vmatpush1.bf16.msra.mxu0 0
          %723 = vmatprep.subr.bf16.mxu0 0
          %724 = vmatpush1.bf16.msra.mxu0 0
          %725 = vmatprep.subr.bf16.mxu0 0
          %726 = vmatpush1.bf16.msra.mxu0 0
          %727 = vmatprep.subr.bf16.mxu0 0
          %728 = vmatpush1.bf16.msra.mxu0 0
          %729 = vmatprep.subr.bf16.mxu0 0
          %730 = vmatpush1.bf16.msra.mxu0 0
          %731 = vmatprep.subr.bf16.mxu0 0
          %732 = vmatpush1.bf16.msra.mxu0 0
          %733 = vmatprep.subr.bf16.mxu0 0
          %734 = vmatpush1.bf16.msra.mxu0 0
          %735 = vmatprep.subr.bf16.mxu0 0
          %736 = vmatpush1.bf16.msra.mxu0 0
          %737 = vmatprep.subr.bf16.mxu0 0
          %738 = vmatpush1.bf16.msra.mxu0 0
          %739 = vmatprep.subr.bf16.mxu0 0
          %740 = vmatpush1.bf16.msra.mxu0 0
          %741 = vmatprep.subr.bf16.mxu0 0
          %742 = vmatpush1.bf16.msra.mxu0 0
          %743 = vmatprep.subr.bf16.mxu0 0
          %744 = vmatpush1.bf16.msra.mxu0 0
          %745 = vmatprep.mubr.bf16.mxu0 0
          %746 = vmatmul.mubr.bf16.gmra.mrb[0].mxu0 %v301
          %v747 = vpop.f32.mrb[0].mxu0
          %v748 = vadd.f32 %v540, %v747
          %v749 = vpop.f32.mrb[0].mxu0
          %v750 = vpop.f32.mrb[0].mxu0
          %v751 = vpop.f32.mrb[0].mxu0
          %752 = vdwg.mxu0
          %v753 = vpack.c.bf16 %v338, %v338
          %v754 = vpack.c.bf16 %v390, %v390
          %v755 = vpack.c.bf16 %v442, %v442
          %v756 = vpack.c.bf16 %v494, %v494
          %vm757 = vcmask 60416
          %758 = vst.msk [vmem:[#allocation2] sm:$0xf] %vm757, %v753
          %759 = vst.msk [vmem:[#allocation2 + $0x4] sm:$0xf] %vm757, %v754
          %760 = vst.msk [vmem:[#allocation2 + $0x8] sm:$0xf] %vm757, %v755
          %761 = vst.msk [vmem:[#allocation2 + $0xc] sm:$0xf] %vm757, %v756
          %v762 = vpack.c.bf16 %v592, %v592
          %v763 = vpack.c.bf16 %v644, %v644
          %v764 = vpack.c.bf16 %v696, %v696
          %v765 = vpack.c.bf16 %v748, %v748
          %766 = vst.msk [vmem:[#allocation3] sm:$0xf] %vm757, %v762
          %767 = vst.msk [vmem:[#allocation3 + $0x4] sm:$0xf] %vm757, %v763
          %768 = vst.msk [vmem:[#allocation3 + $0x8] sm:$0xf] %vm757, %v764
          %769 = vst.msk [vmem:[#allocation3 + $0xc] sm:$0xf] %vm757, %v765
        $region44: #{tpu_custom_call.1} parent=39 // pred_fallthru
          _
        %s770 = smul.u32 %s24, 8
        %s771 = scalar_lea.vmem %s233, %s770
        %v772 = vld [vmem:[%s771] sm:$0xff]
        %v773 = vpack.c.bf16 %v772, %v772
        %v774 = vld [vmem:[%s1] sm:$0xf]
        %v775 = vld [vmem:[%s1 + $0x4] sm:$0xf]
        %v776 = vld [vmem:[%s1 + $0x8] sm:$0xf]
        %v777 = vld [vmem:[%s1 + $0xc] sm:$0xf]
        %v778 = vld [vmem:[%s1 + $0x10] sm:$0xf]
        %v779 = vld [vmem:[%s1 + $0x14] sm:$0xf]
        %v780 = vld [vmem:[%s1 + $0x18] sm:$0xf]
        %v781 = vld [vmem:[%s1 + $0x1c] sm:$0xf]
        %v782 = vld [vmem:[%s1 + $0x20] sm:$0xf]
        %v783 = vld [vmem:[%s1 + $0x24] sm:$0xf]
        %v784 = vld [vmem:[%s1 + $0x28] sm:$0xf]
        %v785 = vld [vmem:[%s1 + $0x2c] sm:$0xf]
        %v786 = vld [vmem:[%s1 + $0x30] sm:$0xf]
        %v787 = vld [vmem:[%s1 + $0x34] sm:$0xf]
        %v788 = vld [vmem:[%s1 + $0x38] sm:$0xf]
        %v789 = vld [vmem:[%s1 + $0x3c] sm:$0xf]
        %v790 = vld [vmem:[%s2] sm:$0x1]
        %v791 = vld [vmem:[%s2 + $0x1] sm:$0x1]
        %v792 = vld [vmem:[%s2 + $0x2] sm:$0x1]
        %v793 = vld [vmem:[%s2 + $0x3] sm:$0x1]
        %v798 = vlaneseq
        %v799 = vshrl.u32 %v798, 7
        %v800 = vsub.s32 0, %v799
        %v801 = vrot.slane %v790, %v800
        %v802 = vlaneseq
        %v803 = vshrl.u32 %v802, 7
        %v804 = vsub.s32 0, %v803
        %v805 = vrot.slane %v791, %v804
        %v806 = vlaneseq
        %v807 = vshrl.u32 %v806, 7
        %v808 = vsub.s32 0, %v807
        %v809 = vrot.slane %v792, %v808
        %v810 = vlaneseq
        %v811 = vshrl.u32 %v810, 7
        %v812 = vsub.s32 0, %v811
        %v813 = vrot.slane %v793, %v812
        %v822 = vunpack.c.l.b16 %v774
        %v823 = vunpack.c.l.b16 %v775
        %v824 = vunpack.c.l.b16 %v776
        %v825 = vunpack.c.l.b16 %v777
        %v826 = vpack.c.b16 %v823, %v822
        %v827 = vpack.c.b16 %v825, %v824
        %vm830 = vcmask 261120
        %v832 = vsel %vm830, %v773, 0
        %834 = vmatprep.subr.bf16.mxu0 0
        %835 = vmatpush1.bf16.msra.mxu0 %v826
        %836 = vmatprep.subr.bf16.mxu0 0
        %837 = vmatpush1.bf16.msra.mxu0 %v827
        %838 = vmatprep.subr.bf16.mxu0 0
        %839 = vmatpush1.bf16.msra.mxu0 0
        %840 = vmatprep.subr.bf16.mxu0 0
        %841 = vmatpush1.bf16.msra.mxu0 0
        %842 = vmatprep.subr.bf16.mxu0 0
        %843 = vmatpush1.bf16.msra.mxu0 0
        %844 = vmatprep.subr.bf16.mxu0 0
        %845 = vmatpush1.bf16.msra.mxu0 0
        %846 = vmatprep.subr.bf16.mxu0 0
        %847 = vmatpush1.bf16.msra.mxu0 0
        %848 = vmatprep.subr.bf16.mxu0 0
        %849 = vmatpush1.bf16.msra.mxu0 0
        %850 = vmatprep.subr.bf16.mxu0 0
        %851 = vmatpush1.bf16.msra.mxu0 0
        %852 = vmatprep.subr.bf16.mxu0 0
        %853 = vmatpush1.bf16.msra.mxu0 0
        %854 = vmatprep.subr.bf16.mxu0 0
        %855 = vmatpush1.bf16.msra.mxu0 0
        %856 = vmatprep.subr.bf16.mxu0 0
        %857 = vmatpush1.bf16.msra.mxu0 0
        %858 = vmatprep.subr.bf16.mxu0 0
        %859 = vmatpush1.bf16.msra.mxu0 0
        %860 = vmatprep.subr.bf16.mxu0 0
        %861 = vmatpush1.bf16.msra.mxu0 0
        %862 = vmatprep.subr.bf16.mxu0 0
        %863 = vmatpush1.bf16.msra.mxu0 0
        %864 = vmatprep.subr.bf16.mxu0 0
        %865 = vmatpush1.bf16.msra.mxu0 0
        %866 = vmatprep.mubr.bf16.mxu0 0
        %867 = vmatmul.mubr.bf16.gmra.mrb[0].mxu0 %v832
        %v868 = vpop.f32.mrb[0].mxu0
        %v869 = vadd.f32 %v801, %v868
        %v870 = vpop.f32.mrb[0].mxu0
        %v871 = vpop.f32.mrb[0].mxu0
        %v872 = vpop.f32.mrb[0].mxu0
        %873 = vdwg.mxu0
        %v878 = vunpack.c.l.b16 %v778
        %v879 = vunpack.c.l.b16 %v779
        %v880 = vunpack.c.l.b16 %v780
        %v881 = vunpack.c.l.b16 %v781
        %v882 = vpack.c.b16 %v879, %v878
        %v883 = vpack.c.b16 %v881, %v880
        %886 = vmatprep.subr.bf16.mxu0 0
        %887 = vmatpush1.bf16.msra.mxu0 %v882
        %888 = vmatprep.subr.bf16.mxu0 0
        %889 = vmatpush1.bf16.msra.mxu0 %v883
        %890 = vmatprep.subr.bf16.mxu0 0
        %891 = vmatpush1.bf16.msra.mxu0 0
        %892 = vmatprep.subr.bf16.mxu0 0
        %893 = vmatpush1.bf16.msra.mxu0 0
        %894 = vmatprep.subr.bf16.mxu0 0
        %895 = vmatpush1.bf16.msra.mxu0 0
        %896 = vmatprep.subr.bf16.mxu0 0
        %897 = vmatpush1.bf16.msra.mxu0 0
        %898 = vmatprep.subr.bf16.mxu0 0
        %899 = vmatpush1.bf16.msra.mxu0 0
        %900 = vmatprep.subr.bf16.mxu0 0
        %901 = vmatpush1.bf16.msra.mxu0 0
        %902 = vmatprep.subr.bf16.mxu0 0
        %903 = vmatpush1.bf16.msra.mxu0 0
        %904 = vmatprep.subr.bf16.mxu0 0
        %905 = vmatpush1.bf16.msra.mxu0 0
        %906 = vmatprep.subr.bf16.mxu0 0
        %907 = vmatpush1.bf16.msra.mxu0 0
        %908 = vmatprep.subr.bf16.mxu0 0
        %909 = vmatpush1.bf16.msra.mxu0 0
        %910 = vmatprep.subr.bf16.mxu0 0
        %911 = vmatpush1.bf16.msra.mxu0 0
        %912 = vmatprep.subr.bf16.mxu0 0
        %913 = vmatpush1.bf16.msra.mxu0 0
        %914 = vmatprep.subr.bf16.mxu0 0
        %915 = vmatpush1.bf16.msra.mxu0 0
        %916 = vmatprep.subr.bf16.mxu0 0
        %917 = vmatpush1.bf16.msra.mxu0 0
        %918 = vmatprep.mubr.bf16.mxu0 0
        %919 = vmatmul.mubr.bf16.gmra.mrb[0].mxu0 %v832
        %v920 = vpop.f32.mrb[0].mxu0
        %v921 = vadd.f32 %v805, %v920
        %v922 = vpop.f32.mrb[0].mxu0
        %v923 = vpop.f32.mrb[0].mxu0
        %v924 = vpop.f32.mrb[0].mxu0
        %925 = vdwg.mxu0
        %v930 = vunpack.c.l.b16 %v782
        %v931 = vunpack.c.l.b16 %v783
        %v932 = vunpack.c.l.b16 %v784
        %v933 = vunpack.c.l.b16 %v785
        %v934 = vpack.c.b16 %v931, %v930
        %v935 = vpack.c.b16 %v933, %v932
        %938 = vmatprep.subr.bf16.mxu0 0
        %939 = vmatpush1.bf16.msra.mxu0 %v934
        %940 = vmatprep.subr.bf16.mxu0 0
        %941 = vmatpush1.bf16.msra.mxu0 %v935
        %942 = vmatprep.subr.bf16.mxu0 0
        %943 = vmatpush1.bf16.msra.mxu0 0
        %944 = vmatprep.subr.bf16.mxu0 0
        %945 = vmatpush1.bf16.msra.mxu0 0
        %946 = vmatprep.subr.bf16.mxu0 0
        %947 = vmatpush1.bf16.msra.mxu0 0
        %948 = vmatprep.subr.bf16.mxu0 0
        %949 = vmatpush1.bf16.msra.mxu0 0
        %950 = vmatprep.subr.bf16.mxu0 0
        %951 = vmatpush1.bf16.msra.mxu0 0
        %952 = vmatprep.subr.bf16.mxu0 0
        %953 = vmatpush1.bf16.msra.mxu0 0
        %954 = vmatprep.subr.bf16.mxu0 0
        %955 = vmatpush1.bf16.msra.mxu0 0
        %956 = vmatprep.subr.bf16.mxu0 0
        %957 = vmatpush1.bf16.msra.mxu0 0
        %958 = vmatprep.subr.bf16.mxu0 0
        %959 = vmatpush1.bf16.msra.mxu0 0
        %960 = vmatprep.subr.bf16.mxu0 0
        %961 = vmatpush1.bf16.msra.mxu0 0
        %962 = vmatprep.subr.bf16.mxu0 0
        %963 = vmatpush1.bf16.msra.mxu0 0
        %964 = vmatprep.subr.bf16.mxu0 0
        %965 = vmatpush1.bf16.msra.mxu0 0
        %966 = vmatprep.subr.bf16.mxu0 0
        %967 = vmatpush1.bf16.msra.mxu0 0
        %968 = vmatprep.subr.bf16.mxu0 0
        %969 = vmatpush1.bf16.msra.mxu0 0
        %970 = vmatprep.mubr.bf16.mxu0 0
        %971 = vmatmul.mubr.bf16.gmra.mrb[0].mxu0 %v832
        %v972 = vpop.f32.mrb[0].mxu0
        %v973 = vadd.f32 %v809, %v972
        %v974 = vpop.f32.mrb[0].mxu0
        %v975 = vpop.f32.mrb[0].mxu0
        %v976 = vpop.f32.mrb[0].mxu0
        %977 = vdwg.mxu0
        %v982 = vunpack.c.l.b16 %v786
        %v983 = vunpack.c.l.b16 %v787
        %v984 = vunpack.c.l.b16 %v788
        %v985 = vunpack.c.l.b16 %v789
        %v986 = vpack.c.b16 %v983, %v982
        %v987 = vpack.c.b16 %v985, %v984
        %990 = vmatprep.subr.bf16.mxu0 0
        %991 = vmatpush1.bf16.msra.mxu0 %v986
        %992 = vmatprep.subr.bf16.mxu0 0
        %993 = vmatpush1.bf16.msra.mxu0 %v987
        %994 = vmatprep.subr.bf16.mxu0 0
        %995 = vmatpush1.bf16.msra.mxu0 0
        %996 = vmatprep.subr.bf16.mxu0 0
        %997 = vmatpush1.bf16.msra.mxu0 0
        %998 = vmatprep.subr.bf16.mxu0 0
        %999 = vmatpush1.bf16.msra.mxu0 0
        %1000 = vmatprep.subr.bf16.mxu0 0
        %1001 = vmatpush1.bf16.msra.mxu0 0
        %1002 = vmatprep.subr.bf16.mxu0 0
        %1003 = vmatpush1.bf16.msra.mxu0 0
        %1004 = vmatprep.subr.bf16.mxu0 0
        %1005 = vmatpush1.bf16.msra.mxu0 0
        %1006 = vmatprep.subr.bf16.mxu0 0
        %1007 = vmatpush1.bf16.msra.mxu0 0
        %1008 = vmatprep.subr.bf16.mxu0 0
        %1009 = vmatpush1.bf16.msra.mxu0 0
        %1010 = vmatprep.subr.bf16.mxu0 0
        %1011 = vmatpush1.bf16.msra.mxu0 0
        %1012 = vmatprep.subr.bf16.mxu0 0
        %1013 = vmatpush1.bf16.msra.mxu0 0
        %1014 = vmatprep.subr.bf16.mxu0 0
        %1015 = vmatpush1.bf16.msra.mxu0 0
        %1016 = vmatprep.subr.bf16.mxu0 0
        %1017 = vmatpush1.bf16.msra.mxu0 0
        %1018 = vmatprep.subr.bf16.mxu0 0
        %1019 = vmatpush1.bf16.msra.mxu0 0
        %1020 = vmatprep.subr.bf16.mxu0 0
        %1021 = vmatpush1.bf16.msra.mxu0 0
        %1022 = vmatprep.mubr.bf16.mxu0 0
        %1023 = vmatmul.mubr.bf16.gmra.mrb[0].mxu0 %v832
        %v1024 = vpop.f32.mrb[0].mxu0
        %v1025 = vadd.f32 %v813, %v1024
        %v1026 = vpop.f32.mrb[0].mxu0
        %v1027 = vpop.f32.mrb[0].mxu0
        %v1028 = vpop.f32.mrb[0].mxu0
        %1029 = vdwg.mxu0
        %v1030 = vpack.c.bf16 %v869, %v869
        %v1031 = vpack.c.bf16 %v921, %v921
        %v1032 = vpack.c.bf16 %v973, %v973
        %v1033 = vpack.c.bf16 %v1025, %v1025
        %v1034 = vld [vmem:[#allocation2] sm:$0xf]
        %v1035 = vld [vmem:[#allocation2 + $0x4] sm:$0xf]
        %v1036 = vld [vmem:[#allocation2 + $0x8] sm:$0xf]
        %v1037 = vld [vmem:[#allocation2 + $0xc] sm:$0xf]
        %vm1038 = vcmask 64512
        %v1040 = vsel %vm1038, %v1030, 0
        %v1043 = vsel %vm1038, %v1034, 0
        %1045 = vmatprep.subr.bf16.mxu0 0
        %1046 = vmatpush1.bf16.xpose.msra.mxu0 %v1043
        %1047 = vmatprep.subr.bf16.mxu0 0
        %1048 = vmatpush1.bf16.xpose.msra.mxu0 0
        %1049 = vmatprep.subr.bf16.mxu0 0
        %1050 = vmatpush1.bf16.xpose.msra.mxu0 0
        %1051 = vmatprep.subr.bf16.mxu0 0
        %1052 = vmatpush1.bf16.xpose.msra.mxu0 0
        %1053 = vmatprep.subr.bf16.mxu0 0
        %1054 = vmatpush1.bf16.xpose.msra.mxu0 0
        %1055 = vmatprep.subr.bf16.mxu0 0
        %1056 = vmatpush1.bf16.xpose.msra.mxu0 0
        %1057 = vmatprep.subr.bf16.mxu0 0
        %1058 = vmatpush1.bf16.xpose.msra.mxu0 0
        %1059 = vmatprep.subr.bf16.mxu0 0
        %1060 = vmatpush1.bf16.xpose.msra.mxu0 0
        %1061 = vmatprep.subr.bf16.mxu0 0
        %1062 = vmatpush1.bf16.xpose.msra.mxu0 0
        %1063 = vmatprep.subr.bf16.mxu0 0
        %1064 = vmatpush1.bf16.xpose.msra.mxu0 0
        %1065 = vmatprep.subr.bf16.mxu0 0
        %1066 = vmatpush1.bf16.xpose.msra.mxu0 0
        %1067 = vmatprep.subr.bf16.mxu0 0
        %1068 = vmatpush1.bf16.xpose.msra.mxu0 0
        %1069 = vmatprep.subr.bf16.mxu0 0
        %1070 = vmatpush1.bf16.xpose.msra.mxu0 0
        %1071 = vmatprep.subr.bf16.mxu0 0
        %1072 = vmatpush1.bf16.xpose.msra.mxu0 0
        %1073 = vmatprep.subr.bf16.mxu0 0
        %1074 = vmatpush1.bf16.xpose.msra.mxu0 0
        %1075 = vmatprep.subr.bf16.mxu0 0
        %1076 = vmatpush1.bf16.xpose.msra.mxu0 0
        %1077 = vmatprep.mubr.bf16.mxu0 0
        %1078 = vmatmul.mubr.bf16.gmra.mrb[0].mxu0 %v1040
        %v1079 = vpop.f32.mrb[0].mxu0
        %v1080 = vadd.f32 0.0, %v1079
        %v1081 = vpop.f32.mrb[0].mxu0
        %v1082 = vpop.f32.mrb[0].mxu0
        %v1083 = vpop.f32.mrb[0].mxu0
        %1084 = vdwg.mxu0
        %v1086 = vsel %vm1038, %v1031, 0
        %v1089 = vsel %vm1038, %v1035, 0
        %1091 = vmatprep.subr.bf16.mxu0 0
        %1092 = vmatpush1.bf16.xpose.msra.mxu0 %v1089
        %1093 = vmatprep.subr.bf16.mxu0 0
        %1094 = vmatpush1.bf16.xpose.msra.mxu0 0
        %1095 = vmatprep.subr.bf16.mxu0 0
        %1096 = vmatpush1.bf16.xpose.msra.mxu0 0
        %1097 = vmatprep.subr.bf16.mxu0 0
        %1098 = vmatpush1.bf16.xpose.msra.mxu0 0
        %1099 = vmatprep.subr.bf16.mxu0 0
        %1100 = vmatpush1.bf16.xpose.msra.mxu0 0
        %1101 = vmatprep.subr.bf16.mxu0 0
        %1102 = vmatpush1.bf16.xpose.msra.mxu0 0
        %1103 = vmatprep.subr.bf16.mxu0 0
        %1104 = vmatpush1.bf16.xpose.msra.mxu0 0
        %1105 = vmatprep.subr.bf16.mxu0 0
        %1106 = vmatpush1.bf16.xpose.msra.mxu0 0
        %1107 = vmatprep.subr.bf16.mxu0 0
        %1108 = vmatpush1.bf16.xpose.msra.mxu0 0
        %1109 = vmatprep.subr.bf16.mxu0 0
        %1110 = vmatpush1.bf16.xpose.msra.mxu0 0
        %1111 = vmatprep.subr.bf16.mxu0 0
        %1112 = vmatpush1.bf16.xpose.msra.mxu0 0
        %1113 = vmatprep.subr.bf16.mxu0 0
        %1114 = vmatpush1.bf16.xpose.msra.mxu0 0
        %1115 = vmatprep.subr.bf16.mxu0 0
        %1116 = vmatpush1.bf16.xpose.msra.mxu0 0
        %1117 = vmatprep.subr.bf16.mxu0 0
        %1118 = vmatpush1.bf16.xpose.msra.mxu0 0
        %1119 = vmatprep.subr.bf16.mxu0 0
        %1120 = vmatpush1.bf16.xpose.msra.mxu0 0
        %1121 = vmatprep.subr.bf16.mxu0 0
        %1122 = vmatpush1.bf16.xpose.msra.mxu0 0
        %1123 = vmatprep.mubr.bf16.mxu0 0
        %1124 = vmatmul.mubr.bf16.gmra.mrb[0].mxu0 %v1086
        %v1125 = vpop.f32.mrb[0].mxu0
        %v1126 = vadd.f32 0.0, %v1125
        %v1127 = vpop.f32.mrb[0].mxu0
        %v1128 = vpop.f32.mrb[0].mxu0
        %v1129 = vpop.f32.mrb[0].mxu0
        %1130 = vdwg.mxu0
        %v1132 = vsel %vm1038, %v1032, 0
        %v1135 = vsel %vm1038, %v1036, 0
        %1137 = vmatprep.subr.bf16.mxu0 0
        %1138 = vmatpush1.bf16.xpose.msra.mxu0 %v1135
        %1139 = vmatprep.subr.bf16.mxu0 0
        %1140 = vmatpush1.bf16.xpose.msra.mxu0 0
        %1141 = vmatprep.subr.bf16.mxu0 0
        %1142 = vmatpush1.bf16.xpose.msra.mxu0 0
        %1143 = vmatprep.subr.bf16.mxu0 0
        %1144 = vmatpush1.bf16.xpose.msra.mxu0 0
        %1145 = vmatprep.subr.bf16.mxu0 0
        %1146 = vmatpush1.bf16.xpose.msra.mxu0 0
        %1147 = vmatprep.subr.bf16.mxu0 0
        %1148 = vmatpush1.bf16.xpose.msra.mxu0 0
        %1149 = vmatprep.subr.bf16.mxu0 0
        %1150 = vmatpush1.bf16.xpose.msra.mxu0 0
        %1151 = vmatprep.subr.bf16.mxu0 0
        %1152 = vmatpush1.bf16.xpose.msra.mxu0 0
        %1153 = vmatprep.subr.bf16.mxu0 0
        %1154 = vmatpush1.bf16.xpose.msra.mxu0 0
        %1155 = vmatprep.subr.bf16.mxu0 0
        %1156 = vmatpush1.bf16.xpose.msra.mxu0 0
        %1157 = vmatprep.subr.bf16.mxu0 0
        %1158 = vmatpush1.bf16.xpose.msra.mxu0 0
        %1159 = vmatprep.subr.bf16.mxu0 0
        %1160 = vmatpush1.bf16.xpose.msra.mxu0 0
        %1161 = vmatprep.subr.bf16.mxu0 0
        %1162 = vmatpush1.bf16.xpose.msra.mxu0 0
        %1163 = vmatprep.subr.bf16.mxu0 0
        %1164 = vmatpush1.bf16.xpose.msra.mxu0 0
        %1165 = vmatprep.subr.bf16.mxu0 0
        %1166 = vmatpush1.bf16.xpose.msra.mxu0 0
        %1167 = vmatprep.subr.bf16.mxu0 0
        %1168 = vmatpush1.bf16.xpose.msra.mxu0 0
        %1169 = vmatprep.mubr.bf16.mxu0 0
        %1170 = vmatmul.mubr.bf16.gmra.mrb[0].mxu0 %v1132
        %v1171 = vpop.f32.mrb[0].mxu0
        %v1172 = vadd.f32 0.0, %v1171
        %v1173 = vpop.f32.mrb[0].mxu0
        %v1174 = vpop.f32.mrb[0].mxu0
        %v1175 = vpop.f32.mrb[0].mxu0
        %1176 = vdwg.mxu0
        %v1178 = vsel %vm1038, %v1033, 0
        %v1181 = vsel %vm1038, %v1037, 0
        %1183 = vmatprep.subr.bf16.mxu0 0
        %1184 = vmatpush1.bf16.xpose.msra.mxu0 %v1181
        %1185 = vmatprep.subr.bf16.mxu0 0
        %1186 = vmatpush1.bf16.xpose.msra.mxu0 0
        %1187 = vmatprep.subr.bf16.mxu0 0
        %1188 = vmatpush1.bf16.xpose.msra.mxu0 0
        %1189 = vmatprep.subr.bf16.mxu0 0
        %1190 = vmatpush1.bf16.xpose.msra.mxu0 0
        %1191 = vmatprep.subr.bf16.mxu0 0
        %1192 = vmatpush1.bf16.xpose.msra.mxu0 0
        %1193 = vmatprep.subr.bf16.mxu0 0
        %1194 = vmatpush1.bf16.xpose.msra.mxu0 0
        %1195 = vmatprep.subr.bf16.mxu0 0
        %1196 = vmatpush1.bf16.xpose.msra.mxu0 0
        %1197 = vmatprep.subr.bf16.mxu0 0
        %1198 = vmatpush1.bf16.xpose.msra.mxu0 0
        %1199 = vmatprep.subr.bf16.mxu0 0
        %1200 = vmatpush1.bf16.xpose.msra.mxu0 0
        %1201 = vmatprep.subr.bf16.mxu0 0
        %1202 = vmatpush1.bf16.xpose.msra.mxu0 0
        %1203 = vmatprep.subr.bf16.mxu0 0
        %1204 = vmatpush1.bf16.xpose.msra.mxu0 0
        %1205 = vmatprep.subr.bf16.mxu0 0
        %1206 = vmatpush1.bf16.xpose.msra.mxu0 0
        %1207 = vmatprep.subr.bf16.mxu0 0
        %1208 = vmatpush1.bf16.xpose.msra.mxu0 0
        %1209 = vmatprep.subr.bf16.mxu0 0
        %1210 = vmatpush1.bf16.xpose.msra.mxu0 0
        %1211 = vmatprep.subr.bf16.mxu0 0
        %1212 = vmatpush1.bf16.xpose.msra.mxu0 0
        %1213 = vmatprep.subr.bf16.mxu0 0
        %1214 = vmatpush1.bf16.xpose.msra.mxu0 0
        %1215 = vmatprep.mubr.bf16.mxu0 0
        %1216 = vmatmul.mubr.bf16.gmra.mrb[0].mxu0 %v1178
        %v1217 = vpop.f32.mrb[0].mxu0
        %v1218 = vadd.f32 0.0, %v1217
        %v1219 = vpop.f32.mrb[0].mxu0
        %v1220 = vpop.f32.mrb[0].mxu0
        %v1221 = vpop.f32.mrb[0].mxu0
        %1222 = vdwg.mxu0
        %v1223 = vsel %vm1038, %v1080, -inf
        %1224 = vmax.xlane.f32.xlu0 %v1223
        %v1225 = vpop.xlane.xlu0 %1224
        %v1226 = vsel %vm1038, %v1126, -inf
        %1227 = vmax.xlane.f32.xlu0 %v1226
        %v1228 = vpop.xlane.xlu0 %1227
        %v1229 = vsel %vm1038, %v1172, -inf
        %1230 = vmax.xlane.f32.xlu0 %v1229
        %v1231 = vpop.xlane.xlu0 %1230
        %v1232 = vsel %vm1038, %v1218, -inf
        %1233 = vmax.xlane.f32.xlu0 %v1232
        %v1234 = vpop.xlane.xlu0 %1233
        %v1235 = vsub.f32 %v1080, %v1225
        %v1236 = vsub.f32 %v1126, %v1228
        %v1237 = vsub.f32 %v1172, %v1231
        %v1238 = vsub.f32 %v1218, %v1234
        %v1239 = vmul.f32 %v1235, 1.442695
        %v1240 = vpow.pop %v1239
        %v1241 = vmul.f32 %v1236, 1.442695
        %v1242 = vpow.pop %v1241
        %v1243 = vmul.f32 %v1237, 1.442695
        %v1244 = vpow.pop %v1243
        %v1245 = vmul.f32 %v1238, 1.442695
        %v1246 = vpow.pop %v1245
        %v1247 = vsel %vm1038, %v1240, 0.0
        %1248 = vadd.xlane.f32.xlu0 %v1247
        %v1249 = vpop.xlane.xlu0 %1248
        %v1250 = vsel %vm1038, %v1242, 0.0
        %1251 = vadd.xlane.f32.xlu0 %v1250
        %v1252 = vpop.xlane.xlu0 %1251
        %v1253 = vsel %vm1038, %v1244, 0.0
        %1254 = vadd.xlane.f32.xlu0 %v1253
        %v1255 = vpop.xlane.xlu0 %1254
        %v1256 = vsel %vm1038, %v1246, 0.0
        %1257 = vadd.xlane.f32.xlu0 %v1256
        %v1258 = vpop.xlane.xlu0 %1257
        %v1259 = vrcp.pop %v1249
        %v1260 = vrcp.pop %v1252
        %v1261 = vrcp.pop %v1255
        %v1262 = vrcp.pop %v1258
        %v1263 = vmul.f32 %v1240, %v1259
        %v1264 = vmul.f32 %v1242, %v1260
        %v1265 = vmul.f32 %v1244, %v1261
        %v1266 = vmul.f32 %v1246, %v1262
        %v1267 = vpack.c.bf16 %v1263, %v1263
        %v1268 = vpack.c.bf16 %v1264, %v1264
        %v1269 = vpack.c.bf16 %v1265, %v1265
        %v1270 = vpack.c.bf16 %v1266, %v1266
        %v1271 = vld [vmem:[#allocation3] sm:$0xf]
        %v1272 = vld [vmem:[#allocation3 + $0x4] sm:$0xf]
        %v1273 = vld [vmem:[#allocation3 + $0x8] sm:$0xf]
        %v1274 = vld [vmem:[#allocation3 + $0xc] sm:$0xf]
        %v1276 = vsel %vm1038, %v1267, 0
        %vm1278 = vcmask 1043456
        %v1280 = vsel %vm1278, %v1271, 0
        %1282 = vmatprep.subr.bf16.mxu0 0
        %1283 = vmatpush1.bf16.msra.mxu0 %v1280
        %1284 = vmatprep.subr.bf16.mxu0 0
        %1285 = vmatpush1.bf16.msra.mxu0 0
        %1286 = vmatprep.subr.bf16.mxu0 0
        %1287 = vmatpush1.bf16.msra.mxu0 0
        %1288 = vmatprep.subr.bf16.mxu0 0
        %1289 = vmatpush1.bf16.msra.mxu0 0
        %1290 = vmatprep.subr.bf16.mxu0 0
        %1291 = vmatpush1.bf16.msra.mxu0 0
        %1292 = vmatprep.subr.bf16.mxu0 0
        %1293 = vmatpush1.bf16.msra.mxu0 0
        %1294 = vmatprep.subr.bf16.mxu0 0
        %1295 = vmatpush1.bf16.msra.mxu0 0
        %1296 = vmatprep.subr.bf16.mxu0 0
        %1297 = vmatpush1.bf16.msra.mxu0 0
        %1298 = vmatprep.subr.bf16.mxu0 0
        %1299 = vmatpush1.bf16.msra.mxu0 0
        %1300 = vmatprep.subr.bf16.mxu0 0
        %1301 = vmatpush1.bf16.msra.mxu0 0
        %1302 = vmatprep.subr.bf16.mxu0 0
        %1303 = vmatpush1.bf16.msra.mxu0 0
        %1304 = vmatprep.subr.bf16.mxu0 0
        %1305 = vmatpush1.bf16.msra.mxu0 0
        %1306 = vmatprep.subr.bf16.mxu0 0
        %1307 = vmatpush1.bf16.msra.mxu0 0
        %1308 = vmatprep.subr.bf16.mxu0 0
        %1309 = vmatpush1.bf16.msra.mxu0 0
        %1310 = vmatprep.subr.bf16.mxu0 0
        %1311 = vmatpush1.bf16.msra.mxu0 0
        %1312 = vmatprep.subr.bf16.mxu0 0
        %1313 = vmatpush1.bf16.msra.mxu0 0
        %1314 = vmatprep.mubr.bf16.mxu0 0
        %1315 = vmatmul.mubr.bf16.gmra.mrb[0].mxu0 %v1276
        %v1316 = vpop.f32.mrb[0].mxu0
        %v1317 = vadd.f32 0.0, %v1316
        %v1318 = vpop.f32.mrb[0].mxu0
        %v1319 = vpop.f32.mrb[0].mxu0
        %v1320 = vpop.f32.mrb[0].mxu0
        %1321 = vdwg.mxu0
        %v1323 = vsel %vm1038, %v1268, 0
        %v1326 = vsel %vm1278, %v1272, 0
        %1328 = vmatprep.subr.bf16.mxu0 0
        %1329 = vmatpush1.bf16.msra.mxu0 %v1326
        %1330 = vmatprep.subr.bf16.mxu0 0
        %1331 = vmatpush1.bf16.msra.mxu0 0
        %1332 = vmatprep.subr.bf16.mxu0 0
        %1333 = vmatpush1.bf16.msra.mxu0 0
        %1334 = vmatprep.subr.bf16.mxu0 0
        %1335 = vmatpush1.bf16.msra.mxu0 0
        %1336 = vmatprep.subr.bf16.mxu0 0
        %1337 = vmatpush1.bf16.msra.mxu0 0
        %1338 = vmatprep.subr.bf16.mxu0 0
        %1339 = vmatpush1.bf16.msra.mxu0 0
        %1340 = vmatprep.subr.bf16.mxu0 0
        %1341 = vmatpush1.bf16.msra.mxu0 0
        %1342 = vmatprep.subr.bf16.mxu0 0
        %1343 = vmatpush1.bf16.msra.mxu0 0
        %1344 = vmatprep.subr.bf16.mxu0 0
        %1345 = vmatpush1.bf16.msra.mxu0 0
        %1346 = vmatprep.subr.bf16.mxu0 0
        %1347 = vmatpush1.bf16.msra.mxu0 0
        %1348 = vmatprep.subr.bf16.mxu0 0
        %1349 = vmatpush1.bf16.msra.mxu0 0
        %1350 = vmatprep.subr.bf16.mxu0 0
        %1351 = vmatpush1.bf16.msra.mxu0 0
        %1352 = vmatprep.subr.bf16.mxu0 0
        %1353 = vmatpush1.bf16.msra.mxu0 0
        %1354 = vmatprep.subr.bf16.mxu0 0
        %1355 = vmatpush1.bf16.msra.mxu0 0
        %1356 = vmatprep.subr.bf16.mxu0 0
        %1357 = vmatpush1.bf16.msra.mxu0 0
        %1358 = vmatprep.subr.bf16.mxu0 0
        %1359 = vmatpush1.bf16.msra.mxu0 0
        %1360 = vmatprep.mubr.bf16.mxu0 0
        %1361 = vmatmul.mubr.bf16.gmra.mrb[0].mxu0 %v1323
        %v1362 = vpop.f32.mrb[0].mxu0
        %v1363 = vadd.f32 0.0, %v1362
        %v1364 = vpop.f32.mrb[0].mxu0
        %v1365 = vpop.f32.mrb[0].mxu0
        %v1366 = vpop.f32.mrb[0].mxu0
        %1367 = vdwg.mxu0
        %v1369 = vsel %vm1038, %v1269, 0
        %v1372 = vsel %vm1278, %v1273, 0
        %1374 = vmatprep.subr.bf16.mxu0 0
        %1375 = vmatpush1.bf16.msra.mxu0 %v1372
        %1376 = vmatprep.subr.bf16.mxu0 0
        %1377 = vmatpush1.bf16.msra.mxu0 0
        %1378 = vmatprep.subr.bf16.mxu0 0
        %1379 = vmatpush1.bf16.msra.mxu0 0
        %1380 = vmatprep.subr.bf16.mxu0 0
        %1381 = vmatpush1.bf16.msra.mxu0 0
        %1382 = vmatprep.subr.bf16.mxu0 0
        %1383 = vmatpush1.bf16.msra.mxu0 0
        %1384 = vmatprep.subr.bf16.mxu0 0
        %1385 = vmatpush1.bf16.msra.mxu0 0
        %1386 = vmatprep.subr.bf16.mxu0 0
        %1387 = vmatpush1.bf16.msra.mxu0 0
        %1388 = vmatprep.subr.bf16.mxu0 0
        %1389 = vmatpush1.bf16.msra.mxu0 0
        %1390 = vmatprep.subr.bf16.mxu0 0
        %1391 = vmatpush1.bf16.msra.mxu0 0
        %1392 = vmatprep.subr.bf16.mxu0 0
        %1393 = vmatpush1.bf16.msra.mxu0 0
        %1394 = vmatprep.subr.bf16.mxu0 0
        %1395 = vmatpush1.bf16.msra.mxu0 0
        %1396 = vmatprep.subr.bf16.mxu0 0
        %1397 = vmatpush1.bf16.msra.mxu0 0
        %1398 = vmatprep.subr.bf16.mxu0 0
        %1399 = vmatpush1.bf16.msra.mxu0 0
        %1400 = vmatprep.subr.bf16.mxu0 0
        %1401 = vmatpush1.bf16.msra.mxu0 0
        %1402 = vmatprep.subr.bf16.mxu0 0
        %1403 = vmatpush1.bf16.msra.mxu0 0
        %1404 = vmatprep.subr.bf16.mxu0 0
        %1405 = vmatpush1.bf16.msra.mxu0 0
        %1406 = vmatprep.mubr.bf16.mxu0 0
        %1407 = vmatmul.mubr.bf16.gmra.mrb[0].mxu0 %v1369
        %v1408 = vpop.f32.mrb[0].mxu0
        %v1409 = vadd.f32 0.0, %v1408
        %v1410 = vpop.f32.mrb[0].mxu0
        %v1411 = vpop.f32.mrb[0].mxu0
        %v1412 = vpop.f32.mrb[0].mxu0
        %1413 = vdwg.mxu0
        %v1415 = vsel %vm1038, %v1270, 0
        %v1418 = vsel %vm1278, %v1274, 0
        %1420 = vmatprep.subr.bf16.mxu0 0
        %1421 = vmatpush1.bf16.msra.mxu0 %v1418
        %1422 = vmatprep.subr.bf16.mxu0 0
        %1423 = vmatpush1.bf16.msra.mxu0 0
        %1424 = vmatprep.subr.bf16.mxu0 0
        %1425 = vmatpush1.bf16.msra.mxu0 0
        %1426 = vmatprep.subr.bf16.mxu0 0
        %1427 = vmatpush1.bf16.msra.mxu0 0
        %1428 = vmatprep.subr.bf16.mxu0 0
        %1429 = vmatpush1.bf16.msra.mxu0 0
        %1430 = vmatprep.subr.bf16.mxu0 0
        %1431 = vmatpush1.bf16.msra.mxu0 0
        %1432 = vmatprep.subr.bf16.mxu0 0
        %1433 = vmatpush1.bf16.msra.mxu0 0
        %1434 = vmatprep.subr.bf16.mxu0 0
        %1435 = vmatpush1.bf16.msra.mxu0 0
        %1436 = vmatprep.subr.bf16.mxu0 0
        %1437 = vmatpush1.bf16.msra.mxu0 0
        %1438 = vmatprep.subr.bf16.mxu0 0
        %1439 = vmatpush1.bf16.msra.mxu0 0
        %1440 = vmatprep.subr.bf16.mxu0 0
        %1441 = vmatpush1.bf16.msra.mxu0 0
        %1442 = vmatprep.subr.bf16.mxu0 0
        %1443 = vmatpush1.bf16.msra.mxu0 0
        %1444 = vmatprep.subr.bf16.mxu0 0
        %1445 = vmatpush1.bf16.msra.mxu0 0
        %1446 = vmatprep.subr.bf16.mxu0 0
        %1447 = vmatpush1.bf16.msra.mxu0 0
        %1448 = vmatprep.subr.bf16.mxu0 0
        %1449 = vmatpush1.bf16.msra.mxu0 0
        %1450 = vmatprep.subr.bf16.mxu0 0
        %1451 = vmatpush1.bf16.msra.mxu0 0
        %1452 = vmatprep.mubr.bf16.mxu0 0
        %1453 = vmatmul.mubr.bf16.gmra.mrb[0].mxu0 %v1415
        %v1454 = vpop.f32.mrb[0].mxu0
        %v1455 = vadd.f32 0.0, %v1454
        %v1456 = vpop.f32.mrb[0].mxu0
        %v1457 = vpop.f32.mrb[0].mxu0
        %v1458 = vpop.f32.mrb[0].mxu0
        %1459 = vdwg.mxu0
        %v1460 = vpack.c.bf16 %v1317, %v1317
        %v1461 = vpack.c.bf16 %v1363, %v1363
        %v1462 = vpack.c.bf16 %v1409, %v1409
        %v1463 = vpack.c.bf16 %v1455, %v1455
        %v1464 = vld [vmem:[%s3] sm:$0xf]
        %v1465 = vld [vmem:[%s3 + $0x4] sm:$0xf]
        %v1466 = vld [vmem:[%s3 + $0x8] sm:$0xf]
        %v1467 = vld [vmem:[%s3 + $0xc] sm:$0xf]
        %v1469 = vsel %vm1038, %v1460, 0
        %v1472 = vsel %vm1278, %v1464, 0
        %1474 = vmatprep.subr.bf16.mxu0 0
        %1475 = vmatpush1.bf16.msra.mxu0 %v1472
        %1476 = vmatprep.subr.bf16.mxu0 0
        %1477 = vmatpush1.bf16.msra.mxu0 0
        %1478 = vmatprep.subr.bf16.mxu0 0
        %1479 = vmatpush1.bf16.msra.mxu0 0
        %1480 = vmatprep.subr.bf16.mxu0 0
        %1481 = vmatpush1.bf16.msra.mxu0 0
        %1482 = vmatprep.subr.bf16.mxu0 0
        %1483 = vmatpush1.bf16.msra.mxu0 0
        %1484 = vmatprep.subr.bf16.mxu0 0
        %1485 = vmatpush1.bf16.msra.mxu0 0
        %1486 = vmatprep.subr.bf16.mxu0 0
        %1487 = vmatpush1.bf16.msra.mxu0 0
        %1488 = vmatprep.subr.bf16.mxu0 0
        %1489 = vmatpush1.bf16.msra.mxu0 0
        %1490 = vmatprep.subr.bf16.mxu0 0
        %1491 = vmatpush1.bf16.msra.mxu0 0
        %1492 = vmatprep.subr.bf16.mxu0 0
        %1493 = vmatpush1.bf16.msra.mxu0 0
        %1494 = vmatprep.subr.bf16.mxu0 0
        %1495 = vmatpush1.bf16.msra.mxu0 0
        %1496 = vmatprep.subr.bf16.mxu0 0
        %1497 = vmatpush1.bf16.msra.mxu0 0
        %1498 = vmatprep.subr.bf16.mxu0 0
        %1499 = vmatpush1.bf16.msra.mxu0 0
        %1500 = vmatprep.subr.bf16.mxu0 0
        %1501 = vmatpush1.bf16.msra.mxu0 0
        %1502 = vmatprep.subr.bf16.mxu0 0
        %1503 = vmatpush1.bf16.msra.mxu0 0
        %1504 = vmatprep.subr.bf16.mxu0 0
        %1505 = vmatpush1.bf16.msra.mxu0 0
        %1506 = vmatprep.mubr.bf16.mxu0 0
        %1507 = vmatmul.mubr.bf16.gmra.mrb[0].mxu0 %v1469
        %v1508 = vpop.f32.mrb[0].mxu0
        %v1509 = vadd.f32 0.0, %v1508
        %v1510 = vpop.f32.mrb[0].mxu0
        %v1511 = vpop.f32.mrb[0].mxu0
        %v1512 = vpop.f32.mrb[0].mxu0
        %1513 = vdwg.mxu0
        %v1515 = vsel %vm1038, %v1461, 0
        %v1518 = vsel %vm1278, %v1465, 0
        %1520 = vmatprep.subr.bf16.mxu0 0
        %1521 = vmatpush1.bf16.msra.mxu0 %v1518
        %1522 = vmatprep.subr.bf16.mxu0 0
        %1523 = vmatpush1.bf16.msra.mxu0 0
        %1524 = vmatprep.subr.bf16.mxu0 0
        %1525 = vmatpush1.bf16.msra.mxu0 0
        %1526 = vmatprep.subr.bf16.mxu0 0
        %1527 = vmatpush1.bf16.msra.mxu0 0
        %1528 = vmatprep.subr.bf16.mxu0 0
        %1529 = vmatpush1.bf16.msra.mxu0 0
        %1530 = vmatprep.subr.bf16.mxu0 0
        %1531 = vmatpush1.bf16.msra.mxu0 0
        %1532 = vmatprep.subr.bf16.mxu0 0
        %1533 = vmatpush1.bf16.msra.mxu0 0
        %1534 = vmatprep.subr.bf16.mxu0 0
        %1535 = vmatpush1.bf16.msra.mxu0 0
        %1536 = vmatprep.subr.bf16.mxu0 0
        %1537 = vmatpush1.bf16.msra.mxu0 0
        %1538 = vmatprep.subr.bf16.mxu0 0
        %1539 = vmatpush1.bf16.msra.mxu0 0
        %1540 = vmatprep.subr.bf16.mxu0 0
        %1541 = vmatpush1.bf16.msra.mxu0 0
        %1542 = vmatprep.subr.bf16.mxu0 0
        %1543 = vmatpush1.bf16.msra.mxu0 0
        %1544 = vmatprep.subr.bf16.mxu0 0
        %1545 = vmatpush1.bf16.msra.mxu0 0
        %1546 = vmatprep.subr.bf16.mxu0 0
        %1547 = vmatpush1.bf16.msra.mxu0 0
        %1548 = vmatprep.subr.bf16.mxu0 0
        %1549 = vmatpush1.bf16.msra.mxu0 0
        %1550 = vmatprep.subr.bf16.mxu0 0
        %1551 = vmatpush1.bf16.msra.mxu0 0
        %1552 = vmatprep.mubr.bf16.mxu0 0
        %1553 = vmatmul.mubr.bf16.gmra.mrb[0].mxu0 %v1515
        %v1554 = vpop.f32.mrb[0].mxu0
        %v1555 = vadd.f32 0.0, %v1554
        %v1556 = vpop.f32.mrb[0].mxu0
        %v1557 = vpop.f32.mrb[0].mxu0
        %v1558 = vpop.f32.mrb[0].mxu0
        %1559 = vdwg.mxu0
        %v1561 = vsel %vm1038, %v1462, 0
        %v1564 = vsel %vm1278, %v1466, 0
        %1566 = vmatprep.subr.bf16.mxu0 0
        %1567 = vmatpush1.bf16.msra.mxu0 %v1564
        %1568 = vmatprep.subr.bf16.mxu0 0
        %1569 = vmatpush1.bf16.msra.mxu0 0
        %1570 = vmatprep.subr.bf16.mxu0 0
        %1571 = vmatpush1.bf16.msra.mxu0 0
        %1572 = vmatprep.subr.bf16.mxu0 0
        %1573 = vmatpush1.bf16.msra.mxu0 0
        %1574 = vmatprep.subr.bf16.mxu0 0
        %1575 = vmatpush1.bf16.msra.mxu0 0
        %1576 = vmatprep.subr.bf16.mxu0 0
        %1577 = vmatpush1.bf16.msra.mxu0 0
        %1578 = vmatprep.subr.bf16.mxu0 0
        %1579 = vmatpush1.bf16.msra.mxu0 0
        %1580 = vmatprep.subr.bf16.mxu0 0
        %1581 = vmatpush1.bf16.msra.mxu0 0
        %1582 = vmatprep.subr.bf16.mxu0 0
        %1583 = vmatpush1.bf16.msra.mxu0 0
        %1584 = vmatprep.subr.bf16.mxu0 0
        %1585 = vmatpush1.bf16.msra.mxu0 0
        %1586 = vmatprep.subr.bf16.mxu0 0
        %1587 = vmatpush1.bf16.msra.mxu0 0
        %1588 = vmatprep.subr.bf16.mxu0 0
        %1589 = vmatpush1.bf16.msra.mxu0 0
        %1590 = vmatprep.subr.bf16.mxu0 0
        %1591 = vmatpush1.bf16.msra.mxu0 0
        %1592 = vmatprep.subr.bf16.mxu0 0
        %1593 = vmatpush1.bf16.msra.mxu0 0
        %1594 = vmatprep.subr.bf16.mxu0 0
        %1595 = vmatpush1.bf16.msra.mxu0 0
        %1596 = vmatprep.subr.bf16.mxu0 0
        %1597 = vmatpush1.bf16.msra.mxu0 0
        %1598 = vmatprep.mubr.bf16.mxu0 0
        %1599 = vmatmul.mubr.bf16.gmra.mrb[0].mxu0 %v1561
        %v1600 = vpop.f32.mrb[0].mxu0
        %v1601 = vadd.f32 0.0, %v1600
        %v1602 = vpop.f32.mrb[0].mxu0
        %v1603 = vpop.f32.mrb[0].mxu0
        %v1604 = vpop.f32.mrb[0].mxu0
        %1605 = vdwg.mxu0
        %v1607 = vsel %vm1038, %v1463, 0
        %v1610 = vsel %vm1278, %v1467, 0
        %1612 = vmatprep.subr.bf16.mxu0 0
        %1613 = vmatpush1.bf16.msra.mxu0 %v1610
        %1614 = vmatprep.subr.bf16.mxu0 0
        %1615 = vmatpush1.bf16.msra.mxu0 0
        %1616 = vmatprep.subr.bf16.mxu0 0
        %1617 = vmatpush1.bf16.msra.mxu0 0
        %1618 = vmatprep.subr.bf16.mxu0 0
        %1619 = vmatpush1.bf16.msra.mxu0 0
        %1620 = vmatprep.subr.bf16.mxu0 0
        %1621 = vmatpush1.bf16.msra.mxu0 0
        %1622 = vmatprep.subr.bf16.mxu0 0
        %1623 = vmatpush1.bf16.msra.mxu0 0
        %1624 = vmatprep.subr.bf16.mxu0 0
        %1625 = vmatpush1.bf16.msra.mxu0 0
        %1626 = vmatprep.subr.bf16.mxu0 0
        %1627 = vmatpush1.bf16.msra.mxu0 0
        %1628 = vmatprep.subr.bf16.mxu0 0
        %1629 = vmatpush1.bf16.msra.mxu0 0
        %1630 = vmatprep.subr.bf16.mxu0 0
        %1631 = vmatpush1.bf16.msra.mxu0 0
        %1632 = vmatprep.subr.bf16.mxu0 0
        %1633 = vmatpush1.bf16.msra.mxu0 0
        %1634 = vmatprep.subr.bf16.mxu0 0
        %1635 = vmatpush1.bf16.msra.mxu0 0
        %1636 = vmatprep.subr.bf16.mxu0 0
        %1637 = vmatpush1.bf16.msra.mxu0 0
        %1638 = vmatprep.subr.bf16.mxu0 0
        %1639 = vmatpush1.bf16.msra.mxu0 0
        %1640 = vmatprep.subr.bf16.mxu0 0
        %1641 = vmatpush1.bf16.msra.mxu0 0
        %1642 = vmatprep.subr.bf16.mxu0 0
        %1643 = vmatpush1.bf16.msra.mxu0 0
        %1644 = vmatprep.mubr.bf16.mxu0 0
        %1645 = vmatmul.mubr.bf16.gmra.mrb[0].mxu0 %v1607
        %v1646 = vpop.f32.mrb[0].mxu0
        %v1647 = vadd.f32 0.0, %v1646
        %v1648 = vpop.f32.mrb[0].mxu0
        %v1649 = vpop.f32.mrb[0].mxu0
        %v1650 = vpop.f32.mrb[0].mxu0
        %1651 = vdwg.mxu0
        %v1652 = vsel %vm830, %v1509, 0.0
        %v1653 = vsel %vm830, %v1555, 0.0
        %v1654 = vadd.f32 %v1652, %v1653
        %v1655 = vsel %vm830, %v1601, 0.0
        %v1656 = vadd.f32 %v1654, %v1655
        %v1657 = vsel %vm830, %v1647, 0.0
        %v1658 = vadd.f32 %v1656, %v1657
        %v1659 = vld [vmem:[%s4] sm:$0x1]
        %v1661 = vlaneseq
        %v1662 = vshrl.u32 %v1661, 7
        %v1663 = vsub.s32 0, %v1662
        %v1664 = vrot.slane %v1659, %v1663
        %v1666 = vadd.f32 %v1658, %v1664
        %1667 = vst.msk [vmem:[%s229] sm:$0xff] %vm830, %v1666
        %s1668 = sand.u32 %s151, 1
        %s1669 = scalar_lea.sflag [#allocation5], %s1668
        %s1670 = sand.u32 %s151, 1
        %s1671 = smul.addr %s1670, 8
        %s1672 = scalar_lea.vmem [#allocation4], %s1671
        // Predicated region
        $region45: #{tpu_custom_call.1} parent=39 // pred_check
          %p1673 = pneg %p161
        $region46: #{tpu_custom_call.1} parent=39 // pred_check_branch
          %1675 = sbr.rel (%p1673) target = $region48
        $region47: #{tpu_custom_call.1} parent=39 // pred_region
          %s1677 = ssub.s32 128, 128
          %1678 = vsyncadd %s1669, %s1677
          %s1679 = sadd.s32 %s24, %s23
          %s1680 = smul.addr %s1679, 128
          %s1681 = scalar_lea.hbm %s5, %s1680
          %s1683 = sshll.u32 %s1672, 4
          %s1684 = int_to_ptr.vmem [resolvable:$true] %s1683
          %1686 = dma.vmem_to_hbm [thread:$0]  %s1684, 128, %s1681, %s1669
        $region48: #{tpu_custom_call.1} parent=39 // pred_fallthru
          _
      $region40: #{tpu_custom_call.1} parent=5 // pred_fallthru
        _
      %p1687 = scmp.le.s32.totalorder 2, %s14
      // Predicated region
      $region49: #{tpu_custom_call.1} parent=5 // pred_check
        %p1688 = pneg %p1687
      $region50: #{tpu_custom_call.1} parent=5 // pred_check_branch
        %1690 = sbr.rel (%p1688) target = $region52
      $region51: #{tpu_custom_call.1} parent=5 // pred_region
        %s1691 = ssub.s32 %s14, 2
        // Predicated region
        $region53: #{tpu_custom_call.1} parent=51 // pred_check
          %p1692 = pneg %p167
        $region54: #{tpu_custom_call.1} parent=51 // pred_check_branch
          %1694 = sbr.rel (%p1692) target = $region56
        $region55: #{tpu_custom_call.1} parent=51 // pred_region
          %s1695 = sand.u32 %s152, 1
          %s1696 = scalar_lea.sflag [#allocation5], %s1695
          %s1697 = sand.u32 %s152, 1
          %s1698 = smul.addr %s1697, 8
          %s1699 = scalar_lea.vmem [#allocation4], %s1698
          %1700 = dma.done %s1696, 128
        $region56: #{tpu_custom_call.1} parent=51 // pred_fallthru
          _
      $region52: #{tpu_custom_call.1} parent=5 // pred_fallthru
        _
    $region6: #{tpu_custom_call.1} parent=1 // loop_footer
      %s18 = sadd.s32 1, %s14
    $region7: #{tpu_custom_call.1} parent=1 // loop_footer_branch
      %13 = sbr.rel target = $region3
    $region8: #{tpu_custom_call.1} parent=1 // loop_exit
      _
    %1701 = vsyncpa [#allocation5], 1
    %s1702 = scalar_lea.sflag [#allocation5], 1
    %1703 = vsyncpa %s1702, 1

</llo_original>
